<compile_context>
chip_gen: v7x
topology: tpu7x:2x2x1
jax: 0.10.0
libtpu: 0.0.40
codegen_flags: <defaults>
</compile_context>

<pallas_src>
import functools
import math

import jax
import jax.numpy as jnp
from jax.experimental import pallas as pl
from jax.experimental.pallas import tpu as pltpu

LN_EPS = 1e-6

# Rows of the packed bias / LayerNorm-parameter table (each padded to HP lanes).
_B_EMB, _B_Q, _B_K, _B_V, _B_O, _B_F1, _B_F2, _B_H1 = range(8)
_G_LN1, _B_LN1, _G_LN2, _B_LN2 = 8, 9, 10, 11
_N_BROWS = 12

VMEM_LIMIT_BYTES = 48 * 1024 * 1024    # safe on every generation (v7x: 64 MiB/TC)
_ACT_BUDGET_BYTES = 20 * 1024 * 1024   # cap on live f32 activation slabs per step


def _round_up(x, m):
    return ((x + m - 1) // m) * m


def _attention_actor_kernel(x_ref, we_ref, wqkv_ref, wmid_ref, wf2_ref,
                            brows_ref, bf2_ref, out_ref, *, A, TB, H, HP):
    """One grid step: (A*TB, Din) agent-major rows -> (A*TB, OUTP) logits."""
    f32 = jnp.float32
    bf16 = jnp.bfloat16

    brows = brows_ref[...]                       # (12, HP) f32

    def brow(i):
        return brows[i:i + 1, :]                 # (1, HP), broadcasts over rows

    inv_h = 1.0 / float(H)

    # Single contiguous block (agent-major rows); no in-kernel concatenate.
    x = x_ref[...]                               # (A*TB, Din) bf16

    # ---- embed + ReLU ----
    e = jnp.dot(x, we_ref[...], preferred_element_type=f32) + brow(_B_EMB)
    e = jnp.maximum(e, 0.0)                      # (A*TB, HP) f32, padded lanes = 0

    # ---- fused, lane-aligned Q/K/V projection (one N = 3*HP matmul) ----
    qkv = jnp.dot(e.astype(bf16), wqkv_ref[...], preferred_element_type=f32)
    q = qkv[:, 0:HP] + brow(_B_Q)                # 128-lane tile-aligned slices
    k = qkv[:, HP:2 * HP] + brow(_B_K)
    v = qkv[:, 2 * HP:3 * HP] + brow(_B_V)

    # ---- single-head attention over the A agents (f32 softmax math) ----
    inv_sqrt_dk = 1.0 / math.sqrt(H)
    q_s = [q[i * TB:(i + 1) * TB, :] for i in range(A)]   # sublane-aligned slabs
    k_s = [k[i * TB:(i + 1) * TB, :] for i in range(A)]
    v_s = [v[i * TB:(i + 1) * TB, :] for i in range(A)]

    attn_slabs = []
    for i in range(A):
        s = [jnp.sum(q_s[i] * k_s[j], axis=-1, keepdims=True) * inv_sqrt_dk
             for j in range(A)]                  # A x (TB, 1) lane reductions
        m = s[0]
        for j in range(1, A):
            m = jnp.maximum(m, s[j])
        p = [jnp.exp(sj - m) for sj in s]
        denom = p[0]
        for j in range(1, A):
            denom = denom + p[j]
        acc = p[0] * v_s[0]
        for j in range(1, A):
            acc = acc + p[j] * v_s[j]
        attn_slabs.append(acc / denom)           # exact divide (actor logits)
    attn = jnp.concatenate(attn_slabs, axis=0)   # (A*TB, HP), tile-aligned copy

    # ---- attention output projection + residual + LayerNorm (post-LN) ----
    o = jnp.dot(attn.astype(bf16), wmid_ref[0], preferred_element_type=f32)
    o = o + brow(_B_O) + e
    # var = E[x^2] - mu^2: two independent lane reductions (overlap on XLU).
    # Padded lanes are exactly zero, so dividing by H (not HP) is exact.
    mu = jnp.sum(o, axis=-1, keepdims=True) * inv_h
    var = jnp.sum(o * o, axis=-1, keepdims=True) * inv_h - mu * mu
    o = (o - mu) * jax.lax.rsqrt(var + LN_EPS) * brow(_G_LN1) + brow(_B_LN1)

    # ---- position-wise FFN + residual + LayerNorm ----
    h1 = jnp.dot(o.astype(bf16), wmid_ref[1], preferred_element_type=f32)
    h1 = jnp.maximum(h1 + brow(_B_F1), 0.0)
    f = jnp.dot(h1.astype(bf16), wmid_ref[2], preferred_element_type=f32)
    f = f + brow(_B_F2) + o
    mu = jnp.sum(f, axis=-1, keepdims=True) * inv_h
    var = jnp.sum(f * f, axis=-1, keepdims=True) * inv_h - mu * mu
    f = (f - mu) * jax.lax.rsqrt(var + LN_EPS) * brow(_G_LN2) + brow(_B_LN2)

    # ---- outer ReLU + actor MLP head -> lane-dense logits ----
    a = jnp.maximum(f, 0.0)
    h2 = jnp.dot(a.astype(bf16), wmid_ref[3], preferred_element_type=f32)
    h2 = jnp.maximum(h2 + brow(_B_H1), 0.0)
    logits = jnp.dot(h2.astype(bf16), wf2_ref[...], preferred_element_type=f32)
    logits = logits + bf2_ref[...]

    out_ref[...] = logits.astype(out_ref.dtype)  # (A*TB, 128k) unmasked stores


def _pick_tb(block_b, batch, n_agents, hp):
    """Largest bf16-friendly batch tile that respects the scoped-VMEM budget."""
    per_row_bytes = 24 * hp * 4          # ~live f32 (rows, HP) slabs in the body
    max_rows = max(_ACT_BUDGET_BYTES // per_row_bytes, 16)
    tb_cap = max(((max_rows // n_agents) // 16) * 16, 16)
    tb = min(int(block_b), tb_cap, _round_up(max(batch, 1), 16))
    return max(_round_up(tb, 16), 16)


def _pad2(w, rows, cols):
    return jnp.pad(w, ((0, rows - w.shape[0]), (0, cols - w.shape[1])))


def attention_actor_logits(x, params, block_b=512, core_parallel=False):
    """x: (B, A, in_dim) -> logits (B, A, out_dim) via one Pallas kernel."""
    B, A, Din = x.shape
    H = params["We"].shape[-1]
    out_dim = params["Wf2"].shape[-1]
    HP = _round_up(H, 128)               # lane-aligned hidden (padded lanes = 0)
    OUTP = _round_up(out_dim, 128)        # lane-dense output columns

    TB = _pick_tb(block_b, B, A, HP)
    Bp = _round_up(B, TB)
    nb = Bp // TB

    # Agent-major, contiguous-per-step input layout built on the wrapper side:
    # block t rows = [agent 0 batch slice t | agent 1 batch slice t | ...].
    xt = jnp.transpose(x.astype(jnp.float32), (1, 0, 2))          # (A, B, Din)
    if Bp != B:
        xt = jnp.pad(xt, ((0, 0), (0, Bp - B), (0, 0)))
    xt = (xt.reshape(A, nb, TB, Din).transpose(1, 0, 2, 3)
            .reshape(nb * A * TB, Din).astype(jnp.bfloat16))

    # Packed, zero-padded bf16 weights; biases / LN params in one f32 table.
    bf16 = jnp.bfloat16
    we_p = _pad2(params["We"], Din, HP).astype(bf16)
    wqkv_p = jnp.concatenate(
        [_pad2(params["Wq"], HP, HP), _pad2(params["Wk"], HP, HP),
         _pad2(params["Wv"], HP, HP)], axis=1).astype(bf16)        # (HP, 3*HP)
    wmid_p = jnp.stack(
        [_pad2(params["Wo"], HP, HP), _pad2(params["W1"], HP, HP),
         _pad2(params["W2"], HP, HP), _pad2(params["Wf1"], HP, HP)]).astype(bf16)
    wf2_p = _pad2(params["Wf2"], HP, OUTP).astype(bf16)
    # NOTE: LN gamma/beta are padded with ZEROS so padded lanes stay zero.
    brow_keys = ("be", "bq", "bk", "bv", "bo", "b1", "b2", "bf1",
                 "g1", "bln1", "g2", "bln2")
    brows_p = jnp.concatenate(
        [_pad2(params[k].astype(jnp.float32), 1, HP) for k in brow_keys], axis=0)
    assert brows_p.shape == (_N_BROWS, HP)
    bf2_p = _pad2(params["bf2"].astype(jnp.float32), 1, OUTP)

    param_vals = [we_p, wqkv_p, wmid_p, wf2_p, brows_p, bf2_p]

    def _full_spec(p):
        nd = p.ndim
        # TODO(synk): at large H on v7x add pipeline_mode=pl.Buffered(1) to
        #             single-buffer these constant weight blocks.
        return pl.BlockSpec(p.shape, lambda t, _nd=nd: (0,) * _nd)

    in_specs = [pl.BlockSpec((A * TB, Din), lambda t: (t, 0))]
    in_specs += [_full_spec(p) for p in param_vals]

    grid_spec = pltpu.PrefetchScalarGridSpec(
        num_scalar_prefetch=0,
        grid=(nb,),
        in_specs=in_specs,
        out_specs=pl.BlockSpec((A * TB, OUTP), lambda t: (t, 0)),
    )

    kernel = functools.partial(_attention_actor_kernel, A=A, TB=TB, H=H, HP=HP)
    dim_sem = (pltpu.CORE_PARALLEL,) if core_parallel else ("parallel",)

    out = pl.pallas_call(
        kernel,
        out_shape=jax.ShapeDtypeStruct((nb * A * TB, OUTP), jnp.float32),
        grid_spec=grid_spec,
        compiler_params=pltpu.CompilerParams(
            dimension_semantics=dim_sem,
            vmem_limit_bytes=VMEM_LIMIT_BYTES),
    )(xt, *param_vals)

    out = (out.reshape(nb, A, TB, OUTP).transpose(1, 0, 2, 3)
              .reshape(A, Bp, OUTP))
    return jnp.transpose(out, (1, 0, 2))[:B, :, :out_dim]


def init_params(key, in_dim, out_dim, hidden):
    """Deterministic synthetic parameters matching the module's shapes."""
    ks = jax.random.split(key, 16)
    s = 0.1

    def lin(k, fan_in, fan_out):
        kw, kb = jax.random.split(k)
        W = jax.random.normal(kw, (fan_in, fan_out), jnp.float32) * s
        b = jax.random.normal(kb, (1, fan_out), jnp.float32) * s
        return W, b

    p = {}
    p["We"], p["be"] = lin(ks[0], in_dim, hidden)      # embed
    p["Wq"], p["bq"] = lin(ks[1], hidden, hidden)      # attention q
    p["Wk"], p["bk"] = lin(ks[2], hidden, hidden)      # attention k
    p["Wv"], p["bv"] = lin(ks[3], hidden, hidden)      # attention v
    p["Wo"], p["bo"] = lin(ks[4], hidden, hidden)      # attention output proj
    p["g1"] = jnp.ones((1, hidden), jnp.float32)       # LN1 gamma
    p["bln1"] = jnp.zeros((1, hidden), jnp.float32)    # LN1 beta
    p["W1"], p["b1"] = lin(ks[5], hidden, hidden)      # FFN
    p["W2"], p["b2"] = lin(ks[6], hidden, hidden)
    p["g2"] = jnp.ones((1, hidden), jnp.float32)       # LN2 gamma
    p["bln2"] = jnp.zeros((1, hidden), jnp.float32)    # LN2 beta
    p["Wf1"], p["bf1"] = lin(ks[7], hidden, hidden)    # actor head layer 1
    p["Wf2"], p["bf2"] = lin(ks[8], hidden, out_dim)   # actor head output
    return p


def attention_actor_forward(state_features, params, sample_key, block_b=512,
                            core_parallel=False):
    """Mirrors AttentionActor.forward; returns (action_one_hot, logits)."""
    *batch_dims, n_agents, in_dim = state_features.shape
    out_dim = params["Wf2"].shape[-1]

    x_flat = state_features.reshape(-1, n_agents, in_dim).astype(jnp.float32)
    logits_flat = attention_actor_logits(x_flat, params, block_b=block_b,
                                         core_parallel=core_parallel)
    logits = logits_flat.reshape(*batch_dims, n_agents, out_dim)

    # OneHotCategorical(logits=x).sample()  (plain-JAX glue, RNG not a hot path)
    idx = jax.random.categorical(sample_key, logits, axis=-1)
    action = jax.nn.one_hot(idx, out_dim, dtype=logits.dtype)
    return action, logits


# ---------------- pure-JAX references for correctness checks -----------------
def _bfr(x):
    return x.astype(jnp.bfloat16).astype(jnp.float32)


def _ln_ref(x, g, b, eps=LN_EPS):
    mu = jnp.mean(x, axis=-1, keepdims=True)
    var = jnp.mean(x * x, axis=-1, keepdims=True) - mu * mu
    return (x - mu) * jax.lax.rsqrt(var + eps) * g + b


def _reference_logits(x, params):
    """Pure-f32 reference (the exact math of the PyTorch module)."""
    e = jax.nn.relu(x @ params["We"] + params["be"])
    q = e @ params["Wq"] + params["bq"]
    k = e @ params["Wk"] + params["bk"]
    v = e @ params["Wv"] + params["bv"]
    s = jnp.einsum("bqd,bkd->bqk", q, k) / jnp.sqrt(jnp.float32(q.shape[-1]))
    p = jax.nn.softmax(s, axis=-1)
    attn = jnp.einsum("bqk,bkd->bqd", p, v)
    o = _ln_ref(attn @ params["Wo"] + params["bo"] + e, params["g1"], params["bln1"])
    h = jax.nn.relu(o @ params["W1"] + params["b1"])
    f = _ln_ref(h @ params["W2"] + params["b2"] + o, params["g2"], params["bln2"])
    a = jax.nn.relu(f)
    h2 = jax.nn.relu(a @ params["Wf1"] + params["bf1"])
    return h2 @ params["Wf2"] + params["bf2"]


def _reference_logits_matched(x, params):
    """Same math with the kernel's bf16 matmul-operand rounding mirrored."""
    hi = jax.lax.Precision.HIGHEST
    W = {k: _bfr(params[k]) for k in ("We", "Wq", "Wk", "Wv", "Wo", "W1", "W2",
                                      "Wf1", "Wf2")}
    H = params["We"].shape[-1]
    e = jax.nn.relu(jnp.dot(_bfr(x), W["We"], precision=hi) + params["be"])
    e_b = _bfr(e)
    q = jnp.dot(e_b, W["Wq"], precision=hi) + params["bq"]
    k = jnp.dot(e_b, W["Wk"], precision=hi) + params["bk"]
    v = jnp.dot(e_b, W["Wv"], precision=hi) + params["bv"]
    s = jnp.einsum("bqd,bkd->bqk", q, k, precision=hi) / math.sqrt(H)
    s = s - jnp.max(s, axis=-1, keepdims=True)
    p = jnp.exp(s)
    attn = jnp.einsum("bqk,bkd->bqd", p, v, precision=hi) / jnp.sum(
        p, axis=-1, keepdims=True)
    o = _ln_ref(jnp.dot(_bfr(attn), W["Wo"], precision=hi) + params["bo"] + e,
                params["g1"], params["bln1"])
    h = jax.nn.relu(jnp.dot(_bfr(o), W["W1"], precision=hi) + params["b1"])
    f = _ln_ref(jnp.dot(_bfr(h), W["W2"], precision=hi) + params["b2"] + o,
                params["g2"], params["bln2"])
    a = jax.nn.relu(f)
    h2 = jax.nn.relu(jnp.dot(_bfr(a), W["Wf1"], precision=hi) + params["bf1"])
    return jnp.dot(_bfr(h2), W["Wf2"], precision=hi) + params["bf2"]


if __name__ == "__main__":
    in_dim, out_dim, hidden = 10, 6, 32
    batch_dims, n_agents = (2, 5), 3

    key = jax.random.PRNGKey(0)
    k_x, k_p, k_sample = jax.random.split(key, 3)

    state_features = jax.random.normal(
        k_x, (*batch_dims, n_agents, in_dim), jnp.float32)
    params = init_params(k_p, in_dim, out_dim, hidden)

    fwd = jax.jit(functools.partial(attention_actor_forward, params=params,
                                    sample_key=k_sample))
    action, logits = fwd(state_features)
    jax.block_until_ready((action, logits))

    assert action.shape == (*batch_dims, n_agents, out_dim)
    assert logits.shape == (*batch_dims, n_agents, out_dim)
    assert bool(jnp.all(jnp.sum(action, axis=-1) == 1.0))

    x_flat = state_features.reshape(-1, n_agents, in_dim)
    ref_m = _reference_logits_matched(x_flat, params).reshape(
        *batch_dims, n_agents, out_dim)
    ref_f = _reference_logits(x_flat, params).reshape(
        *batch_dims, n_agents, out_dim)
    err_m = float(jnp.max(jnp.abs(logits - ref_m)))   # kernel math, bf16-matched
    err_f = float(jnp.max(jnp.abs(logits - ref_f)))   # vs pure-f32 module math
    assert err_m < 5e-3, f"mismatch vs bf16-matched reference: {err_m}"
    assert err_f < 1e-1, f"mismatch vs f32 reference: {err_f}"

    print("KERNEL_OK")
</pallas_src>

<mosaic_0001>
module attributes {stable_mosaic.version = 11 : i64} {
  func.func @_attention_actor_kernel(%arg0: i32, %arg1: memref<48x10xbf16, #tpu.memory_space<vmem>>, %arg2: memref<10x128xbf16, #tpu.memory_space<vmem>>, %arg3: memref<128x384xbf16, #tpu.memory_space<vmem>>, %arg4: memref<4x128x128xbf16, #tpu.memory_space<vmem>>, %arg5: memref<128x128xbf16, #tpu.memory_space<vmem>>, %arg6: memref<12x128xf32, #tpu.memory_space<vmem>>, %arg7: memref<1x128xf32, #tpu.memory_space<vmem>>, %arg8: memref<48x128xf32, #tpu.memory_space<vmem>>) attributes {dimension_semantics = [#tpu.dimension_semantics<parallel>], iteration_bounds = array<i64: 1>, scalar_prefetch = 0 : i64, scratch_operands = 0 : i64, tpu.core_type = #tpu.core_type<tc>, window_params = [{transform_indices = @transform_0, window_bounds = array<i64: 48, 10>}, {pipeline_mode = #tpu.pipeline_mode<synchronous>, transform_indices = @transform_1, window_bounds = array<i64: 10, 128>}, {pipeline_mode = #tpu.pipeline_mode<synchronous>, transform_indices = @transform_2, window_bounds = array<i64: 128, 384>}, {pipeline_mode = #tpu.pipeline_mode<synchronous>, transform_indices = @transform_3, window_bounds = array<i64: 4, 128, 128>}, {pipeline_mode = #tpu.pipeline_mode<synchronous>, transform_indices = @transform_4, window_bounds = array<i64: 128, 128>}, {pipeline_mode = #tpu.pipeline_mode<synchronous>, transform_indices = @transform_5, window_bounds = array<i64: 12, 128>}, {pipeline_mode = #tpu.pipeline_mode<synchronous>, transform_indices = @transform_6, window_bounds = array<i64: 1, 128>}, {transform_indices = @transform_7, window_bounds = array<i64: 48, 128>}]} {
    %c0 = arith.constant 0 : index
    %c0_0 = arith.constant 0 : index
    %0 = vector.load %arg6[%c0, %c0_0] : memref<12x128xf32, #tpu.memory_space<vmem>>, vector<12x128xf32>
    %c0_1 = arith.constant 0 : index
    %c0_2 = arith.constant 0 : index
    %1 = vector.load %arg1[%c0_1, %c0_2] : memref<48x10xbf16, #tpu.memory_space<vmem>>, vector<48x10xbf16>
    %c0_3 = arith.constant 0 : index
    %c0_4 = arith.constant 0 : index
    %2 = vector.load %arg2[%c0_3, %c0_4] : memref<10x128xbf16, #tpu.memory_space<vmem>>, vector<10x128xbf16>
    %cst = arith.constant dense<0.000000e+00> : vector<48x128xf32>
    %3 = tpu.matmul %1, %2, %cst {dimension_numbers = #tpu.dot_dimension_numbers<[1], [0], [0], [1], [0, 0, 1, 1], [], []>} : vector<48x10xbf16>, vector<10x128xbf16>, vector<48x128xf32> -> vector<48x128xf32>
    %4 = vector.extract_strided_slice %0 {offsets = [0, 0], sizes = [1, 128], strides = [1, 1]} : vector<12x128xf32> to vector<1x128xf32>
    %5 = vector.broadcast %4 : vector<1x128xf32> to vector<48x128xf32>
    %6 = arith.addf %3, %5 : vector<48x128xf32>
    %cst_5 = arith.constant 0.000000e+00 : f32
    %7 = vector.broadcast %cst_5 : f32 to vector<48x128xf32>
    %8 = arith.maximumf %6, %7 : vector<48x128xf32>
    %9 = arith.truncf %8 : vector<48x128xf32> to vector<48x128xbf16>
    %c0_6 = arith.constant 0 : index
    %c0_7 = arith.constant 0 : index
    %10 = vector.load %arg3[%c0_6, %c0_7] : memref<128x384xbf16, #tpu.memory_space<vmem>>, vector<128x384xbf16>
    %cst_8 = arith.constant dense<0.000000e+00> : vector<48x384xf32>
    %11 = tpu.matmul %9, %10, %cst_8 {dimension_numbers = #tpu.dot_dimension_numbers<[1], [0], [0], [1], [0, 0, 1, 1], [], []>} : vector<48x128xbf16>, vector<128x384xbf16>, vector<48x384xf32> -> vector<48x384xf32>
    %12 = vector.extract_strided_slice %11 {offsets = [0, 0], sizes = [48, 128], strides = [1, 1]} : vector<48x384xf32> to vector<48x128xf32>
    %13 = vector.extract_strided_slice %0 {offsets = [1, 0], sizes = [1, 128], strides = [1, 1]} : vector<12x128xf32> to vector<1x128xf32>
    %14 = vector.broadcast %13 : vector<1x128xf32> to vector<48x128xf32>
    %15 = arith.addf %12, %14 : vector<48x128xf32>
    %16 = vector.extract_strided_slice %11 {offsets = [0, 128], sizes = [48, 128], strides = [1, 1]} : vector<48x384xf32> to vector<48x128xf32>
    %17 = vector.extract_strided_slice %0 {offsets = [2, 0], sizes = [1, 128], strides = [1, 1]} : vector<12x128xf32> to vector<1x128xf32>
    %18 = vector.broadcast %17 : vector<1x128xf32> to vector<48x128xf32>
    %19 = arith.addf %16, %18 : vector<48x128xf32>
    %20 = vector.extract_strided_slice %11 {offsets = [0, 256], sizes = [48, 128], strides = [1, 1]} : vector<48x384xf32> to vector<48x128xf32>
    %21 = vector.extract_strided_slice %0 {offsets = [3, 0], sizes = [1, 128], strides = [1, 1]} : vector<12x128xf32> to vector<1x128xf32>
    %22 = vector.broadcast %21 : vector<1x128xf32> to vector<48x128xf32>
    %23 = arith.addf %20, %22 : vector<48x128xf32>
    %24 = vector.extract_strided_slice %15 {offsets = [0, 0], sizes = [16, 128], strides = [1, 1]} : vector<48x128xf32> to vector<16x128xf32>
    %25 = vector.extract_strided_slice %15 {offsets = [16, 0], sizes = [16, 128], strides = [1, 1]} : vector<48x128xf32> to vector<16x128xf32>
    %26 = vector.extract_strided_slice %15 {offsets = [32, 0], sizes = [16, 128], strides = [1, 1]} : vector<48x128xf32> to vector<16x128xf32>
    %27 = vector.extract_strided_slice %19 {offsets = [0, 0], sizes = [16, 128], strides = [1, 1]} : vector<48x128xf32> to vector<16x128xf32>
    %28 = vector.extract_strided_slice %19 {offsets = [16, 0], sizes = [16, 128], strides = [1, 1]} : vector<48x128xf32> to vector<16x128xf32>
    %29 = vector.extract_strided_slice %19 {offsets = [32, 0], sizes = [16, 128], strides = [1, 1]} : vector<48x128xf32> to vector<16x128xf32>
    %30 = vector.extract_strided_slice %23 {offsets = [0, 0], sizes = [16, 128], strides = [1, 1]} : vector<48x128xf32> to vector<16x128xf32>
    %31 = vector.extract_strided_slice %23 {offsets = [16, 0], sizes = [16, 128], strides = [1, 1]} : vector<48x128xf32> to vector<16x128xf32>
    %32 = vector.extract_strided_slice %23 {offsets = [32, 0], sizes = [16, 128], strides = [1, 1]} : vector<48x128xf32> to vector<16x128xf32>
    %33 = arith.mulf %24, %27 : vector<16x128xf32>
    %cst_9 = arith.constant dense<0.000000e+00> : vector<16xf32>
    %34 = vector.multi_reduction <add>, %33, %cst_9 [1] : vector<16x128xf32> to vector<16xf32>
    %35 = vector.shape_cast %34 : vector<16xf32> to vector<16x1xf32>
    %cst_10 = arith.constant 0.176776692 : f32
    %36 = vector.broadcast %cst_10 : f32 to vector<16x1xf32>
    %37 = arith.mulf %35, %36 : vector<16x1xf32>
    %38 = arith.mulf %24, %28 : vector<16x128xf32>
    %cst_11 = arith.constant dense<0.000000e+00> : vector<16xf32>
    %39 = vector.multi_reduction <add>, %38, %cst_11 [1] : vector<16x128xf32> to vector<16xf32>
    %40 = vector.shape_cast %39 : vector<16xf32> to vector<16x1xf32>
    %cst_12 = arith.constant 0.176776692 : f32
    %41 = vector.broadcast %cst_12 : f32 to vector<16x1xf32>
    %42 = arith.mulf %40, %41 : vector<16x1xf32>
    %43 = arith.mulf %24, %29 : vector<16x128xf32>
    %cst_13 = arith.constant dense<0.000000e+00> : vector<16xf32>
    %44 = vector.multi_reduction <add>, %43, %cst_13 [1] : vector<16x128xf32> to vector<16xf32>
    %45 = vector.shape_cast %44 : vector<16xf32> to vector<16x1xf32>
    %cst_14 = arith.constant 0.176776692 : f32
    %46 = vector.broadcast %cst_14 : f32 to vector<16x1xf32>
    %47 = arith.mulf %45, %46 : vector<16x1xf32>
    %48 = arith.maximumf %37, %42 : vector<16x1xf32>
    %49 = arith.maximumf %48, %47 : vector<16x1xf32>
    %50 = arith.subf %37, %49 : vector<16x1xf32>
    %51 = math.exp %50 : vector<16x1xf32>
    %52 = arith.subf %42, %49 : vector<16x1xf32>
    %53 = math.exp %52 : vector<16x1xf32>
    %54 = arith.subf %47, %49 : vector<16x1xf32>
    %55 = math.exp %54 : vector<16x1xf32>
    %56 = arith.addf %51, %53 : vector<16x1xf32>
    %57 = arith.addf %56, %55 : vector<16x1xf32>
    %58 = vector.broadcast %51 : vector<16x1xf32> to vector<16x128xf32>
    %59 = arith.mulf %58, %30 : vector<16x128xf32>
    %60 = vector.broadcast %53 : vector<16x1xf32> to vector<16x128xf32>
    %61 = arith.mulf %60, %31 : vector<16x128xf32>
    %62 = arith.addf %59, %61 : vector<16x128xf32>
    %63 = vector.broadcast %55 : vector<16x1xf32> to vector<16x128xf32>
    %64 = arith.mulf %63, %32 : vector<16x128xf32>
    %65 = arith.addf %62, %64 : vector<16x128xf32>
    %66 = vector.broadcast %57 : vector<16x1xf32> to vector<16x128xf32>
    %67 = arith.divf %65, %66 : vector<16x128xf32>
    %68 = arith.mulf %25, %27 : vector<16x128xf32>
    %cst_15 = arith.constant dense<0.000000e+00> : vector<16xf32>
    %69 = vector.multi_reduction <add>, %68, %cst_15 [1] : vector<16x128xf32> to vector<16xf32>
    %70 = vector.shape_cast %69 : vector<16xf32> to vector<16x1xf32>
    %cst_16 = arith.constant 0.176776692 : f32
    %71 = vector.broadcast %cst_16 : f32 to vector<16x1xf32>
    %72 = arith.mulf %70, %71 : vector<16x1xf32>
    %73 = arith.mulf %25, %28 : vector<16x128xf32>
    %cst_17 = arith.constant dense<0.000000e+00> : vector<16xf32>
    %74 = vector.multi_reduction <add>, %73, %cst_17 [1] : vector<16x128xf32> to vector<16xf32>
    %75 = vector.shape_cast %74 : vector<16xf32> to vector<16x1xf32>
    %cst_18 = arith.constant 0.176776692 : f32
    %76 = vector.broadcast %cst_18 : f32 to vector<16x1xf32>
    %77 = arith.mulf %75, %76 : vector<16x1xf32>
    %78 = arith.mulf %25, %29 : vector<16x128xf32>
    %cst_19 = arith.constant dense<0.000000e+00> : vector<16xf32>
    %79 = vector.multi_reduction <add>, %78, %cst_19 [1] : vector<16x128xf32> to vector<16xf32>
    %80 = vector.shape_cast %79 : vector<16xf32> to vector<16x1xf32>
    %cst_20 = arith.constant 0.176776692 : f32
    %81 = vector.broadcast %cst_20 : f32 to vector<16x1xf32>
    %82 = arith.mulf %80, %81 : vector<16x1xf32>
    %83 = arith.maximumf %72, %77 : vector<16x1xf32>
    %84 = arith.maximumf %83, %82 : vector<16x1xf32>
    %85 = arith.subf %72, %84 : vector<16x1xf32>
    %86 = math.exp %85 : vector<16x1xf32>
    %87 = arith.subf %77, %84 : vector<16x1xf32>
    %88 = math.exp %87 : vector<16x1xf32>
    %89 = arith.subf %82, %84 : vector<16x1xf32>
    %90 = math.exp %89 : vector<16x1xf32>
    %91 = arith.addf %86, %88 : vector<16x1xf32>
    %92 = arith.addf %91, %90 : vector<16x1xf32>
    %93 = vector.broadcast %86 : vector<16x1xf32> to vector<16x128xf32>
    %94 = arith.mulf %93, %30 : vector<16x128xf32>
    %95 = vector.broadcast %88 : vector<16x1xf32> to vector<16x128xf32>
    %96 = arith.mulf %95, %31 : vector<16x128xf32>
    %97 = arith.addf %94, %96 : vector<16x128xf32>
    %98 = vector.broadcast %90 : vector<16x1xf32> to vector<16x128xf32>
    %99 = arith.mulf %98, %32 : vector<16x128xf32>
    %100 = arith.addf %97, %99 : vector<16x128xf32>
    %101 = vector.broadcast %92 : vector<16x1xf32> to vector<16x128xf32>
    %102 = arith.divf %100, %101 : vector<16x128xf32>
    %103 = arith.mulf %26, %27 : vector<16x128xf32>
    %cst_21 = arith.constant dense<0.000000e+00> : vector<16xf32>
    %104 = vector.multi_reduction <add>, %103, %cst_21 [1] : vector<16x128xf32> to vector<16xf32>
    %105 = vector.shape_cast %104 : vector<16xf32> to vector<16x1xf32>
    %cst_22 = arith.constant 0.176776692 : f32
    %106 = vector.broadcast %cst_22 : f32 to vector<16x1xf32>
    %107 = arith.mulf %105, %106 : vector<16x1xf32>
    %108 = arith.mulf %26, %28 : vector<16x128xf32>
    %cst_23 = arith.constant dense<0.000000e+00> : vector<16xf32>
    %109 = vector.multi_reduction <add>, %108, %cst_23 [1] : vector<16x128xf32> to vector<16xf32>
    %110 = vector.shape_cast %109 : vector<16xf32> to vector<16x1xf32>
    %cst_24 = arith.constant 0.176776692 : f32
    %111 = vector.broadcast %cst_24 : f32 to vector<16x1xf32>
    %112 = arith.mulf %110, %111 : vector<16x1xf32>
    %113 = arith.mulf %26, %29 : vector<16x128xf32>
    %cst_25 = arith.constant dense<0.000000e+00> : vector<16xf32>
    %114 = vector.multi_reduction <add>, %113, %cst_25 [1] : vector<16x128xf32> to vector<16xf32>
    %115 = vector.shape_cast %114 : vector<16xf32> to vector<16x1xf32>
    %cst_26 = arith.constant 0.176776692 : f32
    %116 = vector.broadcast %cst_26 : f32 to vector<16x1xf32>
    %117 = arith.mulf %115, %116 : vector<16x1xf32>
    %118 = arith.maximumf %107, %112 : vector<16x1xf32>
    %119 = arith.maximumf %118, %117 : vector<16x1xf32>
    %120 = arith.subf %107, %119 : vector<16x1xf32>
    %121 = math.exp %120 : vector<16x1xf32>
    %122 = arith.subf %112, %119 : vector<16x1xf32>
    %123 = math.exp %122 : vector<16x1xf32>
    %124 = arith.subf %117, %119 : vector<16x1xf32>
    %125 = math.exp %124 : vector<16x1xf32>
    %126 = arith.addf %121, %123 : vector<16x1xf32>
    %127 = arith.addf %126, %125 : vector<16x1xf32>
    %128 = vector.broadcast %121 : vector<16x1xf32> to vector<16x128xf32>
    %129 = arith.mulf %128, %30 : vector<16x128xf32>
    %130 = vector.broadcast %123 : vector<16x1xf32> to vector<16x128xf32>
    %131 = arith.mulf %130, %31 : vector<16x128xf32>
    %132 = arith.addf %129, %131 : vector<16x128xf32>
    %133 = vector.broadcast %125 : vector<16x1xf32> to vector<16x128xf32>
    %134 = arith.mulf %133, %32 : vector<16x128xf32>
    %135 = arith.addf %132, %134 : vector<16x128xf32>
    %136 = vector.broadcast %127 : vector<16x1xf32> to vector<16x128xf32>
    %137 = arith.divf %135, %136 : vector<16x128xf32>
    %138 = tpu.concatenate %67, %102, %137 in 0 : vector<16x128xf32>, vector<16x128xf32>, vector<16x128xf32> -> vector<48x128xf32>
    %139 = arith.truncf %138 : vector<48x128xf32> to vector<48x128xbf16>
    %c0_27 = arith.constant 0 : index
    %c0_28 = arith.constant 0 : index
    %c0_29 = arith.constant 0 : index
    %140 = vector.load %arg4[%c0_27, %c0_28, %c0_29] : memref<4x128x128xbf16, #tpu.memory_space<vmem>>, vector<1x128x128xbf16>
    %141 = vector.shape_cast %140 : vector<1x128x128xbf16> to vector<128x128xbf16>
    %cst_30 = arith.constant dense<0.000000e+00> : vector<48x128xf32>
    %142 = tpu.matmul %139, %141, %cst_30 {dimension_numbers = #tpu.dot_dimension_numbers<[1], [0], [0], [1], [0, 0, 1, 1], [], []>} : vector<48x128xbf16>, vector<128x128xbf16>, vector<48x128xf32> -> vector<48x128xf32>
    %143 = vector.extract_strided_slice %0 {offsets = [4, 0], sizes = [1, 128], strides = [1, 1]} : vector<12x128xf32> to vector<1x128xf32>
    %144 = vector.broadcast %143 : vector<1x128xf32> to vector<48x128xf32>
    %145 = arith.addf %142, %144 : vector<48x128xf32>
    %146 = arith.addf %145, %8 : vector<48x128xf32>
    %cst_31 = arith.constant dense<0.000000e+00> : vector<48xf32>
    %147 = vector.multi_reduction <add>, %146, %cst_31 [1] : vector<48x128xf32> to vector<48xf32>
    %148 = vector.shape_cast %147 : vector<48xf32> to vector<48x1xf32>
    %cst_32 = arith.constant 3.125000e-02 : f32
    %149 = vector.broadcast %cst_32 : f32 to vector<48x1xf32>
    %150 = arith.mulf %148, %149 : vector<48x1xf32>
    %151 = arith.mulf %146, %146 : vector<48x128xf32>
    %cst_33 = arith.constant dense<0.000000e+00> : vector<48xf32>
    %152 = vector.multi_reduction <add>, %151, %cst_33 [1] : vector<48x128xf32> to vector<48xf32>
    %153 = vector.shape_cast %152 : vector<48xf32> to vector<48x1xf32>
    %cst_34 = arith.constant 3.125000e-02 : f32
    %154 = vector.broadcast %cst_34 : f32 to vector<48x1xf32>
    %155 = arith.mulf %153, %154 : vector<48x1xf32>
    %156 = arith.mulf %150, %150 : vector<48x1xf32>
    %157 = arith.subf %155, %156 : vector<48x1xf32>
    %158 = vector.broadcast %150 : vector<48x1xf32> to vector<48x128xf32>
    %159 = arith.subf %146, %158 : vector<48x128xf32>
    %cst_35 = arith.constant 9.99999997E-7 : f32
    %160 = vector.broadcast %cst_35 : f32 to vector<48x1xf32>
    %161 = arith.addf %157, %160 : vector<48x1xf32>
    %162 = math.rsqrt %161 : vector<48x1xf32>
    %163 = vector.broadcast %162 : vector<48x1xf32> to vector<48x128xf32>
    %164 = arith.mulf %159, %163 : vector<48x128xf32>
    %165 = vector.extract_strided_slice %0 {offsets = [8, 0], sizes = [1, 128], strides = [1, 1]} : vector<12x128xf32> to vector<1x128xf32>
    %166 = vector.broadcast %165 : vector<1x128xf32> to vector<48x128xf32>
    %167 = arith.mulf %164, %166 : vector<48x128xf32>
    %168 = vector.extract_strided_slice %0 {offsets = [9, 0], sizes = [1, 128], strides = [1, 1]} : vector<12x128xf32> to vector<1x128xf32>
    %169 = vector.broadcast %168 : vector<1x128xf32> to vector<48x128xf32>
    %170 = arith.addf %167, %169 : vector<48x128xf32>
    %171 = arith.truncf %170 : vector<48x128xf32> to vector<48x128xbf16>
    %c1 = arith.constant 1 : index
    %c0_36 = arith.constant 0 : index
    %c0_37 = arith.constant 0 : index
    %172 = vector.load %arg4[%c1, %c0_36, %c0_37] : memref<4x128x128xbf16, #tpu.memory_space<vmem>>, vector<1x128x128xbf16>
    %173 = vector.shape_cast %172 : vector<1x128x128xbf16> to vector<128x128xbf16>
    %cst_38 = arith.constant dense<0.000000e+00> : vector<48x128xf32>
    %174 = tpu.matmul %171, %173, %cst_38 {dimension_numbers = #tpu.dot_dimension_numbers<[1], [0], [0], [1], [0, 0, 1, 1], [], []>} : vector<48x128xbf16>, vector<128x128xbf16>, vector<48x128xf32> -> vector<48x128xf32>
    %175 = vector.extract_strided_slice %0 {offsets = [5, 0], sizes = [1, 128], strides = [1, 1]} : vector<12x128xf32> to vector<1x128xf32>
    %176 = vector.broadcast %175 : vector<1x128xf32> to vector<48x128xf32>
    %177 = arith.addf %174, %176 : vector<48x128xf32>
    %cst_39 = arith.constant 0.000000e+00 : f32
    %178 = vector.broadcast %cst_39 : f32 to vector<48x128xf32>
    %179 = arith.maximumf %177, %178 : vector<48x128xf32>
    %180 = arith.truncf %179 : vector<48x128xf32> to vector<48x128xbf16>
    %c2 = arith.constant 2 : index
    %c0_40 = arith.constant 0 : index
    %c0_41 = arith.constant 0 : index
    %181 = vector.load %arg4[%c2, %c0_40, %c0_41] : memref<4x128x128xbf16, #tpu.memory_space<vmem>>, vector<1x128x128xbf16>
    %182 = vector.shape_cast %181 : vector<1x128x128xbf16> to vector<128x128xbf16>
    %cst_42 = arith.constant dense<0.000000e+00> : vector<48x128xf32>
    %183 = tpu.matmul %180, %182, %cst_42 {dimension_numbers = #tpu.dot_dimension_numbers<[1], [0], [0], [1], [0, 0, 1, 1], [], []>} : vector<48x128xbf16>, vector<128x128xbf16>, vector<48x128xf32> -> vector<48x128xf32>
    %184 = vector.extract_strided_slice %0 {offsets = [6, 0], sizes = [1, 128], strides = [1, 1]} : vector<12x128xf32> to vector<1x128xf32>
    %185 = vector.broadcast %184 : vector<1x128xf32> to vector<48x128xf32>
    %186 = arith.addf %183, %185 : vector<48x128xf32>
    %187 = arith.addf %186, %170 : vector<48x128xf32>
    %cst_43 = arith.constant dense<0.000000e+00> : vector<48xf32>
    %188 = vector.multi_reduction <add>, %187, %cst_43 [1] : vector<48x128xf32> to vector<48xf32>
    %189 = vector.shape_cast %188 : vector<48xf32> to vector<48x1xf32>
    %cst_44 = arith.constant 3.125000e-02 : f32
    %190 = vector.broadcast %cst_44 : f32 to vector<48x1xf32>
    %191 = arith.mulf %189, %190 : vector<48x1xf32>
    %192 = arith.mulf %187, %187 : vector<48x128xf32>
    %cst_45 = arith.constant dense<0.000000e+00> : vector<48xf32>
    %193 = vector.multi_reduction <add>, %192, %cst_45 [1] : vector<48x128xf32> to vector<48xf32>
    %194 = vector.shape_cast %193 : vector<48xf32> to vector<48x1xf32>
    %cst_46 = arith.constant 3.125000e-02 : f32
    %195 = vector.broadcast %cst_46 : f32 to vector<48x1xf32>
    %196 = arith.mulf %194, %195 : vector<48x1xf32>
    %197 = arith.mulf %191, %191 : vector<48x1xf32>
    %198 = arith.subf %196, %197 : vector<48x1xf32>
    %199 = vector.broadcast %191 : vector<48x1xf32> to vector<48x128xf32>
    %200 = arith.subf %187, %199 : vector<48x128xf32>
    %cst_47 = arith.constant 9.99999997E-7 : f32
    %201 = vector.broadcast %cst_47 : f32 to vector<48x1xf32>
    %202 = arith.addf %198, %201 : vector<48x1xf32>
    %203 = math.rsqrt %202 : vector<48x1xf32>
    %204 = vector.broadcast %203 : vector<48x1xf32> to vector<48x128xf32>
    %205 = arith.mulf %200, %204 : vector<48x128xf32>
    %206 = vector.extract_strided_slice %0 {offsets = [10, 0], sizes = [1, 128], strides = [1, 1]} : vector<12x128xf32> to vector<1x128xf32>
    %207 = vector.broadcast %206 : vector<1x128xf32> to vector<48x128xf32>
    %208 = arith.mulf %205, %207 : vector<48x128xf32>
    %209 = vector.extract_strided_slice %0 {offsets = [11, 0], sizes = [1, 128], strides = [1, 1]} : vector<12x128xf32> to vector<1x128xf32>
    %210 = vector.broadcast %209 : vector<1x128xf32> to vector<48x128xf32>
    %211 = arith.addf %208, %210 : vector<48x128xf32>
    %cst_48 = arith.constant 0.000000e+00 : f32
    %212 = vector.broadcast %cst_48 : f32 to vector<48x128xf32>
    %213 = arith.maximumf %211, %212 : vector<48x128xf32>
    %214 = arith.truncf %213 : vector<48x128xf32> to vector<48x128xbf16>
    %c3 = arith.constant 3 : index
    %c0_49 = arith.constant 0 : index
    %c0_50 = arith.constant 0 : index
    %215 = vector.load %arg4[%c3, %c0_49, %c0_50] : memref<4x128x128xbf16, #tpu.memory_space<vmem>>, vector<1x128x128xbf16>
    %216 = vector.shape_cast %215 : vector<1x128x128xbf16> to vector<128x128xbf16>
    %cst_51 = arith.constant dense<0.000000e+00> : vector<48x128xf32>
    %217 = tpu.matmul %214, %216, %cst_51 {dimension_numbers = #tpu.dot_dimension_numbers<[1], [0], [0], [1], [0, 0, 1, 1], [], []>} : vector<48x128xbf16>, vector<128x128xbf16>, vector<48x128xf32> -> vector<48x128xf32>
    %218 = vector.extract_strided_slice %0 {offsets = [7, 0], sizes = [1, 128], strides = [1, 1]} : vector<12x128xf32> to vector<1x128xf32>
    %219 = vector.broadcast %218 : vector<1x128xf32> to vector<48x128xf32>
    %220 = arith.addf %217, %219 : vector<48x128xf32>
    %cst_52 = arith.constant 0.000000e+00 : f32
    %221 = vector.broadcast %cst_52 : f32 to vector<48x128xf32>
    %222 = arith.maximumf %220, %221 : vector<48x128xf32>
    %223 = arith.truncf %222 : vector<48x128xf32> to vector<48x128xbf16>
    %c0_53 = arith.constant 0 : index
    %c0_54 = arith.constant 0 : index
    %224 = vector.load %arg5[%c0_53, %c0_54] : memref<128x128xbf16, #tpu.memory_space<vmem>>, vector<128x128xbf16>
    %cst_55 = arith.constant dense<0.000000e+00> : vector<48x128xf32>
    %225 = tpu.matmul %223, %224, %cst_55 {dimension_numbers = #tpu.dot_dimension_numbers<[1], [0], [0], [1], [0, 0, 1, 1], [], []>} : vector<48x128xbf16>, vector<128x128xbf16>, vector<48x128xf32> -> vector<48x128xf32>
    %c0_56 = arith.constant 0 : index
    %c0_57 = arith.constant 0 : index
    %226 = vector.load %arg7[%c0_56, %c0_57] : memref<1x128xf32, #tpu.memory_space<vmem>>, vector<1x128xf32>
    %227 = vector.broadcast %226 : vector<1x128xf32> to vector<48x128xf32>
    %228 = arith.addf %225, %227 : vector<48x128xf32>
    %c0_58 = arith.constant 0 : index
    %c0_59 = arith.constant 0 : index
    %229 = vector.load %arg8[%c0_58, %c0_59] : memref<48x128xf32, #tpu.memory_space<vmem>>, vector<48x128xf32>
    tpu.vector_store %arg8[%c0_58, %c0_59], %228 {strides = array<i32>} : memref<48x128xf32, #tpu.memory_space<vmem>>, vector<48x128xf32>,
    return
  }
  func.func @transform_0(%arg0: i32) -> (i32, i32) {
    %c0_i32 = arith.constant 0 : i32
    %c0_i32_0 = arith.constant 0 : i32
    return %arg0, %c0_i32 : i32, i32
  }
  func.func @transform_1(%arg0: i32) -> (i32, i32) {
    %c0_i32 = arith.constant 0 : i32
    %c0_i32_0 = arith.constant 0 : i32
    %c0_i32_1 = arith.constant 0 : i32
    return %c0_i32, %c0_i32_0 : i32, i32
  }
  func.func @transform_2(%arg0: i32) -> (i32, i32) {
    %c0_i32 = arith.constant 0 : i32
    %c0_i32_0 = arith.constant 0 : i32
    %c0_i32_1 = arith.constant 0 : i32
    return %c0_i32, %c0_i32_0 : i32, i32
  }
  func.func @transform_3(%arg0: i32) -> (i32, i32, i32) {
    %c0_i32 = arith.constant 0 : i32
    %c0_i32_0 = arith.constant 0 : i32
    %c0_i32_1 = arith.constant 0 : i32
    %c0_i32_2 = arith.constant 0 : i32
    return %c0_i32, %c0_i32_0, %c0_i32_1 : i32, i32, i32
  }
  func.func @transform_4(%arg0: i32) -> (i32, i32) {
    %c0_i32 = arith.constant 0 : i32
    %c0_i32_0 = arith.constant 0 : i32
    %c0_i32_1 = arith.constant 0 : i32
    return %c0_i32, %c0_i32_0 : i32, i32
  }
  func.func @transform_5(%arg0: i32) -> (i32, i32) {
    %c0_i32 = arith.constant 0 : i32
    %c0_i32_0 = arith.constant 0 : i32
    %c0_i32_1 = arith.constant 0 : i32
    return %c0_i32, %c0_i32_0 : i32, i32
  }
  func.func @transform_6(%arg0: i32) -> (i32, i32) {
    %c0_i32 = arith.constant 0 : i32
    %c0_i32_0 = arith.constant 0 : i32
    %c0_i32_1 = arith.constant 0 : i32
    return %c0_i32, %c0_i32_0 : i32, i32
  }
  func.func @transform_7(%arg0: i32) -> (i32, i32) {
    %c0_i32 = arith.constant 0 : i32
    %c0_i32_0 = arith.constant 0 : i32
    return %arg0, %c0_i32 : i32, i32
  }
}

</mosaic_0001>

<llo_original>
// kernel: attention_actor_forward.1
$region0: #{attention_actor_forward.1}
  #allocation0 [shape = 'u32[]', space=smem, size = 0x4, offset = 0x4, fixed_abs, tag = 'smem constant byte address 0x4 - core index']
  #allocation1 [shape = 'u32[144,128]{1,0:T(1,128)}', space=vmem, size = 0x12000, scoped, tag = 'internal scratch']
  %s0 = inlined_call_operand.vmem [shape: bf16[48,10], index: 0, kind: input, shape index: {}]
  %s1 = inlined_call_operand.vmem [shape: bf16[10,128], index: 1, kind: input, shape index: {}]
  %s2 = inlined_call_operand.vmem [shape: bf16[128,384], index: 2, kind: input, shape index: {}]
  %s3 = inlined_call_operand.vmem [shape: bf16[4,128,128], index: 3, kind: input, shape index: {}]
  %s4 = inlined_call_operand.vmem [shape: bf16[128,128], index: 4, kind: input, shape index: {}]
  %s5 = inlined_call_operand.vmem [shape: f32[12,128], index: 5, kind: input, shape index: {}]
  %s6 = inlined_call_operand.vmem [shape: f32[1,128], index: 6, kind: input, shape index: {}]
  %s7 = inlined_call_operand.vmem [shape: f32[48,128], index: 7, kind: output, shape index: {}]
  %s8 = sld [smem:[#allocation0]]
  $region38: #{attention_actor_forward.1} parent=0
    _
  %s10 = ssub.s32 1, %s8
  %s11 = scalar_select 0, %s10, %s8
  // Predicated region
  $region2: #{attention_actor_forward.1} parent=0 // pred_check
    _
  $region3: #{attention_actor_forward.1} parent=0 // pred_check_branch
    %13 = sbr.rel (0) target = $region5
  $region4: #{attention_actor_forward.1} parent=0 // pred_region
    _
  $region5: #{attention_actor_forward.1} parent=0 // pred_fallthru
    _
  // Predicated region
  $region6: #{attention_actor_forward.1} parent=0 // pred_check
    _
  $region7: #{attention_actor_forward.1} parent=0 // pred_check_branch
    %15 = sbr.rel (0) target = $region9
  $region8: #{attention_actor_forward.1} parent=0 // pred_region
    _
  $region9: #{attention_actor_forward.1} parent=0 // pred_fallthru
    _
  // Predicated region
  $region10: #{attention_actor_forward.1} parent=0 // pred_check
    _
  $region11: #{attention_actor_forward.1} parent=0 // pred_check_branch
    %17 = sbr.rel (0) target = $region13
  $region12: #{attention_actor_forward.1} parent=0 // pred_region
    _
  $region13: #{attention_actor_forward.1} parent=0 // pred_fallthru
    _
  // Predicated region
  $region14: #{attention_actor_forward.1} parent=0 // pred_check
    _
  $region15: #{attention_actor_forward.1} parent=0 // pred_check_branch
    %19 = sbr.rel (0) target = $region17
  $region16: #{attention_actor_forward.1} parent=0 // pred_region
    _
  $region17: #{attention_actor_forward.1} parent=0 // pred_fallthru
    _
  // Predicated region
  $region18: #{attention_actor_forward.1} parent=0 // pred_check
    _
  $region19: #{attention_actor_forward.1} parent=0 // pred_check_branch
    %21 = sbr.rel (0) target = $region21
  $region20: #{attention_actor_forward.1} parent=0 // pred_region
    _
  $region21: #{attention_actor_forward.1} parent=0 // pred_fallthru
    _
  // Predicated region
  $region22: #{attention_actor_forward.1} parent=0 // pred_check
    _
  $region23: #{attention_actor_forward.1} parent=0 // pred_check_branch
    %23 = sbr.rel (0) target = $region25
  $region24: #{attention_actor_forward.1} parent=0 // pred_region
    _
  $region25: #{attention_actor_forward.1} parent=0 // pred_fallthru
    _
  // Predicated region
  $region26: #{attention_actor_forward.1} parent=0 // pred_check
    _
  $region27: #{attention_actor_forward.1} parent=0 // pred_check_branch
    %25 = sbr.rel (0) target = $region29
  $region28: #{attention_actor_forward.1} parent=0 // pred_region
    _
  $region29: #{attention_actor_forward.1} parent=0 // pred_fallthru
    _
  %v27 = vld [vmem:[%s5] sm:$0xff]
  %v28 = vld [vmem:[%s5 + $0x8] sm:$0xf]
  %v29 = vld [vmem:[%s0] sm:$0xf]
  %v30 = vld [vmem:[%s0 + $0x4] sm:$0xf]
  %v31 = vld [vmem:[%s0 + $0x8] sm:$0xf]
  %v32 = vld [vmem:[%s0 + $0xc] sm:$0xf]
  %v33 = vld [vmem:[%s0 + $0x10] sm:$0xf]
  %v34 = vld [vmem:[%s0 + $0x14] sm:$0xf]
  %v35 = vld [vmem:[%s1] sm:$0xf]
  %v36 = vld [vmem:[%s1 + $0x4] sm:$0x1]
  %v37 = vlaneseq
  %v38 = vshrl.u32 %v37, 7
  %v39 = vsub.s32 0, %v38
  %v40 = vrot.slane %v27, %v39
  %v47 = vunpack.c.l.b16 %v29
  %v48 = vunpack.c.l.b16 %v30
  %v49 = vunpack.c.l.b16 %v31
  %v50 = vunpack.c.l.b16 %v32
  %v51 = vunpack.c.l.b16 %v33
  %v52 = vunpack.c.l.b16 %v34
  %v53 = vpack.c.b16 %v48, %v47
  %v54 = vpack.c.b16 %v50, %v49
  %v55 = vpack.c.b16 %v52, %v51
  %v58 = vunpack.c.l.b16 %v35
  %v59 = vunpack.c.l.b16 %v36
  %v60 = vpack.c.b16 %v59, %v58
  %vm61 = vcmask 80896
  %v63 = vsel %vm61, %v53, 0
  %v66 = vsel %vm61, %v54, 0
  %v69 = vsel %vm61, %v55, 0
  %vm71 = vcmask 1044480
  %v73 = vsel %vm71, %v60, 0
  %75 = vmatprep.subr.bf16.mxu0 0
  %76 = vmatpush1.bf16.msra.mxu0 %v73
  %77 = vmatprep.subr.bf16.mxu0 0
  %78 = vmatpush1.bf16.msra.mxu0 0
  %79 = vmatprep.subr.bf16.mxu0 0
  %80 = vmatpush1.bf16.msra.mxu0 0
  %81 = vmatprep.subr.bf16.mxu0 0
  %82 = vmatpush1.bf16.msra.mxu0 0
  %83 = vmatprep.subr.bf16.mxu0 0
  %84 = vmatpush1.bf16.msra.mxu0 0
  %85 = vmatprep.subr.bf16.mxu0 0
  %86 = vmatpush1.bf16.msra.mxu0 0
  %87 = vmatprep.subr.bf16.mxu0 0
  %88 = vmatpush1.bf16.msra.mxu0 0
  %89 = vmatprep.subr.bf16.mxu0 0
  %90 = vmatpush1.bf16.msra.mxu0 0
  %91 = vmatprep.subr.bf16.mxu0 0
  %92 = vmatpush1.bf16.msra.mxu0 0
  %93 = vmatprep.subr.bf16.mxu0 0
  %94 = vmatpush1.bf16.msra.mxu0 0
  %95 = vmatprep.subr.bf16.mxu0 0
  %96 = vmatpush1.bf16.msra.mxu0 0
  %97 = vmatprep.subr.bf16.mxu0 0
  %98 = vmatpush1.bf16.msra.mxu0 0
  %99 = vmatprep.subr.bf16.mxu0 0
  %100 = vmatpush1.bf16.msra.mxu0 0
  %101 = vmatprep.subr.bf16.mxu0 0
  %102 = vmatpush1.bf16.msra.mxu0 0
  %103 = vmatprep.subr.bf16.mxu0 0
  %104 = vmatpush1.bf16.msra.mxu0 0
  %105 = vmatprep.subr.bf16.mxu0 0
  %106 = vmatpush1.bf16.msra.mxu0 0
  %107 = vmatprep.mubr.bf16.mxu0 0
  %108 = vmatmul.mubr.bf16.gmra.mrb[0].mxu0 %v63
  %v109 = vpop.f32.mrb[0].mxu0
  %v110 = vadd.f32 %v40, %v109
  %v111 = vpop.f32.mrb[0].mxu0
  %v112 = vpop.f32.mrb[0].mxu0
  %v113 = vadd.f32 %v40, %v112
  %v114 = vpop.f32.mrb[0].mxu0
  %115 = vmatprep.mubr.bf16.mxu0 0
  %116 = vmatmul.mubr.bf16.gmra.mrb[0].mxu0 %v66
  %v117 = vpop.f32.mrb[0].mxu0
  %v118 = vadd.f32 %v40, %v117
  %v119 = vpop.f32.mrb[0].mxu0
  %v120 = vpop.f32.mrb[0].mxu0
  %v121 = vadd.f32 %v40, %v120
  %v122 = vpop.f32.mrb[0].mxu0
  %123 = vmatprep.mubr.bf16.mxu0 0
  %124 = vmatmul.mubr.bf16.gmra.mrb[0].mxu0 %v69
  %v125 = vpop.f32.mrb[0].mxu0
  %v126 = vadd.f32 %v40, %v125
  %v127 = vpop.f32.mrb[0].mxu0
  %v128 = vpop.f32.mrb[0].mxu0
  %v129 = vadd.f32 %v40, %v128
  %v130 = vpop.f32.mrb[0].mxu0
  %131 = vdwg.mxu0
  %v132 = vmax.f32 %v110, 0.0
  %v133 = vmax.f32 %v113, 0.0
  %v134 = vmax.f32 %v118, 0.0
  %v135 = vmax.f32 %v121, 0.0
  %v136 = vmax.f32 %v126, 0.0
  %v137 = vmax.f32 %v129, 0.0
  %v138 = vpack.c.bf16 %v133, %v132
  %v139 = vpack.c.bf16 %v135, %v134
  %v140 = vpack.c.bf16 %v137, %v136
  %v141 = vld [vmem:[%s2] sm:$0xff]
  %v142 = vld [vmem:[%s2 + $0x8] sm:$0xf]
  %v143 = vld [vmem:[%s2 + $0xc] sm:$0xff]
  %v144 = vld [vmem:[%s2 + $0x14] sm:$0xf]
  %v145 = vld [vmem:[%s2 + $0x18] sm:$0xff]
  %v146 = vld [vmem:[%s2 + $0x20] sm:$0xf]
  %v147 = vld [vmem:[%s2 + $0x24] sm:$0xff]
  %v148 = vld [vmem:[%s2 + $0x2c] sm:$0xf]
  %v149 = vld [vmem:[%s2 + $0x30] sm:$0xff]
  %v150 = vld [vmem:[%s2 + $0x38] sm:$0xf]
  %v151 = vld [vmem:[%s2 + $0x3c] sm:$0xff]
  %v152 = vld [vmem:[%s2 + $0x44] sm:$0xf]
  %v153 = vld [vmem:[%s2 + $0x48] sm:$0xff]
  %v154 = vld [vmem:[%s2 + $0x50] sm:$0xf]
  %v155 = vld [vmem:[%s2 + $0x54] sm:$0xff]
  %v156 = vld [vmem:[%s2 + $0x5c] sm:$0xf]
  %v157 = vld [vmem:[%s2 + $0x60] sm:$0xff]
  %v158 = vld [vmem:[%s2 + $0x68] sm:$0xf]
  %v159 = vld [vmem:[%s2 + $0x6c] sm:$0xff]
  %v160 = vld [vmem:[%s2 + $0x74] sm:$0xf]
  %v161 = vld [vmem:[%s2 + $0x78] sm:$0xff]
  %v162 = vld [vmem:[%s2 + $0x80] sm:$0xf]
  %v163 = vld [vmem:[%s2 + $0x84] sm:$0xff]
  %v164 = vld [vmem:[%s2 + $0x8c] sm:$0xf]
  %v165 = vld [vmem:[%s2 + $0x90] sm:$0xff]
  %v166 = vld [vmem:[%s2 + $0x98] sm:$0xf]
  %v167 = vld [vmem:[%s2 + $0x9c] sm:$0xff]
  %v168 = vld [vmem:[%s2 + $0xa4] sm:$0xf]
  %v169 = vld [vmem:[%s2 + $0xa8] sm:$0xff]
  %v170 = vld [vmem:[%s2 + $0xb0] sm:$0xf]
  %v171 = vld [vmem:[%s2 + $0xb4] sm:$0xff]
  %v172 = vld [vmem:[%s2 + $0xbc] sm:$0xf]
  %v205 = vunpack.c.l.b16 %v141
  %v206 = vunpack.c.h.b16 %v141
  %v207 = vunpack.c.l.b16 %v142
  %v208 = vunpack.c.l.b16 %v143
  %v209 = vunpack.c.h.b16 %v143
  %v210 = vunpack.c.l.b16 %v144
  %v211 = vunpack.c.l.b16 %v145
  %v212 = vunpack.c.h.b16 %v145
  %v213 = vunpack.c.l.b16 %v146
  %v214 = vunpack.c.l.b16 %v147
  %v215 = vunpack.c.h.b16 %v147
  %v216 = vunpack.c.l.b16 %v148
  %v217 = vunpack.c.l.b16 %v149
  %v218 = vunpack.c.h.b16 %v149
  %v219 = vunpack.c.l.b16 %v150
  %v220 = vunpack.c.l.b16 %v151
  %v221 = vunpack.c.h.b16 %v151
  %v222 = vunpack.c.l.b16 %v152
  %v223 = vunpack.c.l.b16 %v153
  %v224 = vunpack.c.h.b16 %v153
  %v225 = vunpack.c.l.b16 %v154
  %v226 = vunpack.c.l.b16 %v155
  %v227 = vunpack.c.h.b16 %v155
  %v228 = vunpack.c.l.b16 %v156
  %v229 = vunpack.c.l.b16 %v157
  %v230 = vunpack.c.h.b16 %v157
  %v231 = vunpack.c.l.b16 %v158
  %v232 = vunpack.c.l.b16 %v159
  %v233 = vunpack.c.h.b16 %v159
  %v234 = vunpack.c.l.b16 %v160
  %v235 = vunpack.c.l.b16 %v161
  %v236 = vunpack.c.h.b16 %v161
  %v237 = vunpack.c.l.b16 %v162
  %v238 = vunpack.c.l.b16 %v163
  %v239 = vunpack.c.h.b16 %v163
  %v240 = vunpack.c.l.b16 %v164
  %v241 = vunpack.c.l.b16 %v165
  %v242 = vunpack.c.h.b16 %v165
  %v243 = vunpack.c.l.b16 %v166
  %v244 = vunpack.c.l.b16 %v167
  %v245 = vunpack.c.h.b16 %v167
  %v246 = vunpack.c.l.b16 %v168
  %v247 = vunpack.c.l.b16 %v169
  %v248 = vunpack.c.h.b16 %v169
  %v249 = vunpack.c.l.b16 %v170
  %v250 = vunpack.c.l.b16 %v171
  %v251 = vunpack.c.h.b16 %v171
  %v252 = vunpack.c.l.b16 %v172
  %v253 = vpack.c.b16 %v208, %v205
  %v254 = vpack.c.b16 %v209, %v206
  %v255 = vpack.c.b16 %v210, %v207
  %v256 = vpack.c.b16 %v214, %v211
  %v257 = vpack.c.b16 %v215, %v212
  %v258 = vpack.c.b16 %v216, %v213
  %v259 = vpack.c.b16 %v220, %v217
  %v260 = vpack.c.b16 %v221, %v218
  %v261 = vpack.c.b16 %v222, %v219
  %v262 = vpack.c.b16 %v226, %v223
  %v263 = vpack.c.b16 %v227, %v224
  %v264 = vpack.c.b16 %v228, %v225
  %v265 = vpack.c.b16 %v232, %v229
  %v266 = vpack.c.b16 %v233, %v230
  %v267 = vpack.c.b16 %v234, %v231
  %v268 = vpack.c.b16 %v238, %v235
  %v269 = vpack.c.b16 %v239, %v236
  %v270 = vpack.c.b16 %v240, %v237
  %v271 = vpack.c.b16 %v244, %v241
  %v272 = vpack.c.b16 %v245, %v242
  %v273 = vpack.c.b16 %v246, %v243
  %v274 = vpack.c.b16 %v250, %v247
  %v275 = vpack.c.b16 %v251, %v248
  %v276 = vpack.c.b16 %v252, %v249
  %301 = vmatprep.subr.bf16.mxu0 %v254
  %302 = vmatpush1.bf16.msra.mxu0 %v253
  %303 = vmatprep.subr.bf16.mxu0 %v257
  %304 = vmatpush1.bf16.msra.mxu0 %v256
  %305 = vmatprep.subr.bf16.mxu0 %v260
  %306 = vmatpush1.bf16.msra.mxu0 %v259
  %307 = vmatprep.subr.bf16.mxu0 %v263
  %308 = vmatpush1.bf16.msra.mxu0 %v262
  %309 = vmatprep.subr.bf16.mxu0 %v266
  %310 = vmatpush1.bf16.msra.mxu0 %v265
  %311 = vmatprep.subr.bf16.mxu0 %v269
  %312 = vmatpush1.bf16.msra.mxu0 %v268
  %313 = vmatprep.subr.bf16.mxu0 %v272
  %314 = vmatpush1.bf16.msra.mxu0 %v271
  %315 = vmatprep.subr.bf16.mxu0 %v275
  %316 = vmatpush1.bf16.msra.mxu0 %v274
  %317 = vmatprep.subr.bf16.mxu0 0
  %318 = vmatpush1.bf16.msra.mxu0 0
  %319 = vmatprep.subr.bf16.mxu0 0
  %320 = vmatpush1.bf16.msra.mxu0 0
  %321 = vmatprep.subr.bf16.mxu0 0
  %322 = vmatpush1.bf16.msra.mxu0 0
  %323 = vmatprep.subr.bf16.mxu0 0
  %324 = vmatpush1.bf16.msra.mxu0 0
  %325 = vmatprep.subr.bf16.mxu0 0
  %326 = vmatpush1.bf16.msra.mxu0 0
  %327 = vmatprep.subr.bf16.mxu0 0
  %328 = vmatpush1.bf16.msra.mxu0 0
  %329 = vmatprep.subr.bf16.mxu0 0
  %330 = vmatpush1.bf16.msra.mxu0 0
  %331 = vmatprep.subr.bf16.mxu0 0
  %332 = vmatpush1.bf16.msra.mxu0 0
  %333 = vmatprep.mubr.bf16.mxu0 0
  %334 = vmatmul.mubr.bf16.gmra.mrb[0].mxu0 %v138
  %v335 = vpop.f32.mrb[0].mxu0
  %v336 = vadd.f32 0.0, %v335
  %v337 = vpop.f32.mrb[0].mxu0
  %v338 = vadd.f32 0.0, %v337
  %v339 = vpop.f32.mrb[0].mxu0
  %v340 = vadd.f32 0.0, %v339
  %v341 = vpop.f32.mrb[0].mxu0
  %v342 = vadd.f32 0.0, %v341
  %343 = vmatprep.mubr.bf16.mxu0 0
  %344 = vmatmul.mubr.bf16.gmra.mrb[0].mxu0 %v139
  %v345 = vpop.f32.mrb[0].mxu0
  %v346 = vadd.f32 0.0, %v345
  %v347 = vpop.f32.mrb[0].mxu0
  %v348 = vadd.f32 0.0, %v347
  %v349 = vpop.f32.mrb[0].mxu0
  %v350 = vadd.f32 0.0, %v349
  %v351 = vpop.f32.mrb[0].mxu0
  %v352 = vadd.f32 0.0, %v351
  %353 = vmatprep.mubr.bf16.mxu0 0
  %354 = vmatmul.mubr.bf16.gmra.mrb[0].mxu0 %v140
  %v355 = vpop.f32.mrb[0].mxu0
  %v356 = vadd.f32 0.0, %v355
  %v357 = vpop.f32.mrb[0].mxu0
  %v358 = vadd.f32 0.0, %v357
  %v359 = vpop.f32.mrb[0].mxu0
  %v360 = vadd.f32 0.0, %v359
  %v361 = vpop.f32.mrb[0].mxu0
  %v362 = vadd.f32 0.0, %v361
  %363 = vdwg.mxu0
  %364 = vmatprep.subr.bf16.mxu0 0
  %365 = vmatpush1.bf16.msra.mxu0 %v255
  %366 = vmatprep.subr.bf16.mxu0 0
  %367 = vmatpush1.bf16.msra.mxu0 %v258
  %368 = vmatprep.subr.bf16.mxu0 0
  %369 = vmatpush1.bf16.msra.mxu0 %v261
  %370 = vmatprep.subr.bf16.mxu0 0
  %371 = vmatpush1.bf16.msra.mxu0 %v264
  %372 = vmatprep.subr.bf16.mxu0 0
  %373 = vmatpush1.bf16.msra.mxu0 %v267
  %374 = vmatprep.subr.bf16.mxu0 0
  %375 = vmatpush1.bf16.msra.mxu0 %v270
  %376 = vmatprep.subr.bf16.mxu0 0
  %377 = vmatpush1.bf16.msra.mxu0 %v273
  %378 = vmatprep.subr.bf16.mxu0 0
  %379 = vmatpush1.bf16.msra.mxu0 %v276
  %380 = vmatprep.subr.bf16.mxu0 0
  %381 = vmatpush1.bf16.msra.mxu0 0
  %382 = vmatprep.subr.bf16.mxu0 0
  %383 = vmatpush1.bf16.msra.mxu0 0
  %384 = vmatprep.subr.bf16.mxu0 0
  %385 = vmatpush1.bf16.msra.mxu0 0
  %386 = vmatprep.subr.bf16.mxu0 0
  %387 = vmatpush1.bf16.msra.mxu0 0
  %388 = vmatprep.subr.bf16.mxu0 0
  %389 = vmatpush1.bf16.msra.mxu0 0
  %390 = vmatprep.subr.bf16.mxu0 0
  %391 = vmatpush1.bf16.msra.mxu0 0
  %392 = vmatprep.subr.bf16.mxu0 0
  %393 = vmatpush1.bf16.msra.mxu0 0
  %394 = vmatprep.subr.bf16.mxu0 0
  %395 = vmatpush1.bf16.msra.mxu0 0
  %396 = vmatprep.mubr.bf16.mxu0 0
  %397 = vmatmul.mubr.bf16.gmra.mrb[0].mxu0 %v138
  %v398 = vpop.f32.mrb[0].mxu0
  %v399 = vadd.f32 0.0, %v398
  %v400 = vpop.f32.mrb[0].mxu0
  %v401 = vpop.f32.mrb[0].mxu0
  %v402 = vadd.f32 0.0, %v401
  %v403 = vpop.f32.mrb[0].mxu0
  %404 = vmatprep.mubr.bf16.mxu0 0
  %405 = vmatmul.mubr.bf16.gmra.mrb[0].mxu0 %v139
  %v406 = vpop.f32.mrb[0].mxu0
  %v407 = vadd.f32 0.0, %v406
  %v408 = vpop.f32.mrb[0].mxu0
  %v409 = vpop.f32.mrb[0].mxu0
  %v410 = vadd.f32 0.0, %v409
  %v411 = vpop.f32.mrb[0].mxu0
  %412 = vmatprep.mubr.bf16.mxu0 0
  %413 = vmatmul.mubr.bf16.gmra.mrb[0].mxu0 %v140
  %v414 = vpop.f32.mrb[0].mxu0
  %v415 = vadd.f32 0.0, %v414
  %v416 = vpop.f32.mrb[0].mxu0
  %v417 = vpop.f32.mrb[0].mxu0
  %v418 = vadd.f32 0.0, %v417
  %v419 = vpop.f32.mrb[0].mxu0
  %420 = vdwg.mxu0
  %v421 = vlaneseq
  %v422 = vshrl.u32 %v421, 7
  %v423 = vsub.s32 1, %v422
  %v424 = vrot.slane %v27, %v423
  %v425 = vadd.f32 %v336, %v424
  %v426 = vadd.f32 %v340, %v424
  %v427 = vadd.f32 %v346, %v424
  %v428 = vadd.f32 %v350, %v424
  %v429 = vadd.f32 %v356, %v424
  %v430 = vadd.f32 %v360, %v424
  %v431 = vlaneseq
  %v432 = vshrl.u32 %v431, 7
  %v433 = vsub.s32 2, %v432
  %v434 = vrot.slane %v27, %v433
  %v435 = vadd.f32 %v338, %v434
  %v436 = vadd.f32 %v342, %v434
  %v437 = vadd.f32 %v348, %v434
  %v438 = vadd.f32 %v352, %v434
  %v439 = vadd.f32 %v358, %v434
  %v440 = vadd.f32 %v362, %v434
  %v441 = vlaneseq
  %v442 = vshrl.u32 %v441, 7
  %v443 = vsub.s32 3, %v442
  %v444 = vrot.slane %v27, %v443
  %v445 = vadd.f32 %v399, %v444
  %v446 = vadd.f32 %v402, %v444
  %v447 = vadd.f32 %v407, %v444
  %v448 = vadd.f32 %v410, %v444
  %v449 = vadd.f32 %v415, %v444
  %v450 = vadd.f32 %v418, %v444
  %v451 = vmul.f32 %v425, %v435
  %v452 = vmul.f32 %v426, %v436
  %453 = vadd.xlane.f32.xlu0 %v451
  %v454 = vpop.xlane.xlu0 %453
  %455 = vadd.xlane.f32.xlu0 %v452
  %v456 = vpop.xlane.xlu0 %455
  %v457 = vmul.f32 %v454, 0.17677669
  %v458 = vmul.f32 %v456, 0.17677669
  %v459 = vmul.f32 %v425, %v437
  %v460 = vmul.f32 %v426, %v438
  %461 = vadd.xlane.f32.xlu0 %v459
  %v462 = vpop.xlane.xlu0 %461
  %463 = vadd.xlane.f32.xlu0 %v460
  %v464 = vpop.xlane.xlu0 %463
  %v465 = vmul.f32 %v462, 0.17677669
  %v466 = vmul.f32 %v464, 0.17677669
  %v467 = vmul.f32 %v425, %v439
  %v468 = vmul.f32 %v426, %v440
  %469 = vadd.xlane.f32.xlu0 %v467
  %v470 = vpop.xlane.xlu0 %469
  %471 = vadd.xlane.f32.xlu0 %v468
  %v472 = vpop.xlane.xlu0 %471
  %v473 = vmul.f32 %v470, 0.17677669
  %v474 = vmul.f32 %v472, 0.17677669
  %v475 = vmax.f32 %v457, %v465
  %v476 = vmax.f32 %v458, %v466
  %v477 = vmax.f32 %v475, %v473
  %v478 = vmax.f32 %v476, %v474
  %v479 = vsub.f32 %v457, %v477
  %v480 = vsub.f32 %v458, %v478
  %v481 = vmul.f32 %v479, 1.442695
  %v482 = vpow.pop %v481
  %v483 = vmul.f32 %v480, 1.442695
  %v484 = vpow.pop %v483
  %v485 = vsub.f32 %v465, %v477
  %v486 = vsub.f32 %v466, %v478
  %v487 = vmul.f32 %v485, 1.442695
  %v488 = vpow.pop %v487
  %v489 = vmul.f32 %v486, 1.442695
  %v490 = vpow.pop %v489
  %v491 = vsub.f32 %v473, %v477
  %v492 = vsub.f32 %v474, %v478
  %v493 = vmul.f32 %v491, 1.442695
  %v494 = vpow.pop %v493
  %v495 = vmul.f32 %v492, 1.442695
  %v496 = vpow.pop %v495
  %v497 = vadd.f32 %v482, %v488
  %v498 = vadd.f32 %v484, %v490
  %v499 = vadd.f32 %v497, %v494
  %v500 = vadd.f32 %v498, %v496
  %v501 = vmul.f32 %v482, %v445
  %v502 = vmul.f32 %v484, %v446
  %v503 = vmul.f32 %v488, %v447
  %v504 = vmul.f32 %v490, %v448
  %v505 = vadd.f32 %v501, %v503
  %v506 = vadd.f32 %v502, %v504
  %v507 = vmul.f32 %v494, %v449
  %v508 = vmul.f32 %v496, %v450
  %v509 = vadd.f32 %v505, %v507
  %v510 = vadd.f32 %v506, %v508
  %v511 = vrcp.pop %v499
  %v512 = vmul.f32 %v509, %v511
  %v513 = vrcp.pop %v500
  %v514 = vmul.f32 %v510, %v513
  %v515 = vmul.f32 %v427, %v435
  %v516 = vmul.f32 %v428, %v436
  %517 = vadd.xlane.f32.xlu0 %v515
  %v518 = vpop.xlane.xlu0 %517
  %519 = vadd.xlane.f32.xlu0 %v516
  %v520 = vpop.xlane.xlu0 %519
  %v521 = vmul.f32 %v518, 0.17677669
  %v522 = vmul.f32 %v520, 0.17677669
  %v523 = vmul.f32 %v427, %v437
  %v524 = vmul.f32 %v428, %v438
  %525 = vadd.xlane.f32.xlu0 %v523
  %v526 = vpop.xlane.xlu0 %525
  %527 = vadd.xlane.f32.xlu0 %v524
  %v528 = vpop.xlane.xlu0 %527
  %v529 = vmul.f32 %v526, 0.17677669
  %v530 = vmul.f32 %v528, 0.17677669
  %v531 = vmul.f32 %v427, %v439
  %v532 = vmul.f32 %v428, %v440
  %533 = vadd.xlane.f32.xlu0 %v531
  %v534 = vpop.xlane.xlu0 %533
  %535 = vadd.xlane.f32.xlu0 %v532
  %v536 = vpop.xlane.xlu0 %535
  %v537 = vmul.f32 %v534, 0.17677669
  %v538 = vmul.f32 %v536, 0.17677669
  %v539 = vmax.f32 %v521, %v529
  %v540 = vmax.f32 %v522, %v530
  %v541 = vmax.f32 %v539, %v537
  %v542 = vmax.f32 %v540, %v538
  %v543 = vsub.f32 %v521, %v541
  %v544 = vsub.f32 %v522, %v542
  %v545 = vmul.f32 %v543, 1.442695
  %v546 = vpow.pop %v545
  %v547 = vmul.f32 %v544, 1.442695
  %v548 = vpow.pop %v547
  %v549 = vsub.f32 %v529, %v541
  %v550 = vsub.f32 %v530, %v542
  %v551 = vmul.f32 %v549, 1.442695
  %v552 = vpow.pop %v551
  %v553 = vmul.f32 %v550, 1.442695
  %v554 = vpow.pop %v553
  %v555 = vsub.f32 %v537, %v541
  %v556 = vsub.f32 %v538, %v542
  %v557 = vmul.f32 %v555, 1.442695
  %v558 = vpow.pop %v557
  %v559 = vmul.f32 %v556, 1.442695
  %v560 = vpow.pop %v559
  %v561 = vadd.f32 %v546, %v552
  %v562 = vadd.f32 %v548, %v554
  %v563 = vadd.f32 %v561, %v558
  %v564 = vadd.f32 %v562, %v560
  %v565 = vmul.f32 %v546, %v445
  %v566 = vmul.f32 %v548, %v446
  %v567 = vmul.f32 %v552, %v447
  %v568 = vmul.f32 %v554, %v448
  %v569 = vadd.f32 %v565, %v567
  %v570 = vadd.f32 %v566, %v568
  %v571 = vmul.f32 %v558, %v449
  %v572 = vmul.f32 %v560, %v450
  %v573 = vadd.f32 %v569, %v571
  %v574 = vadd.f32 %v570, %v572
  %v575 = vrcp.pop %v563
  %v576 = vmul.f32 %v573, %v575
  %v577 = vrcp.pop %v564
  %v578 = vmul.f32 %v574, %v577
  %v579 = vmul.f32 %v429, %v435
  %v580 = vmul.f32 %v430, %v436
  %581 = vadd.xlane.f32.xlu0 %v579
  %v582 = vpop.xlane.xlu0 %581
  %583 = vadd.xlane.f32.xlu0 %v580
  %v584 = vpop.xlane.xlu0 %583
  %v585 = vmul.f32 %v582, 0.17677669
  %v586 = vmul.f32 %v584, 0.17677669
  %v587 = vmul.f32 %v429, %v437
  %v588 = vmul.f32 %v430, %v438
  %589 = vadd.xlane.f32.xlu0 %v587
  %v590 = vpop.xlane.xlu0 %589
  %591 = vadd.xlane.f32.xlu0 %v588
  %v592 = vpop.xlane.xlu0 %591
  %v593 = vmul.f32 %v590, 0.17677669
  %v594 = vmul.f32 %v592, 0.17677669
  %v595 = vmul.f32 %v429, %v439
  %v596 = vmul.f32 %v430, %v440
  %597 = vadd.xlane.f32.xlu0 %v595
  %v598 = vpop.xlane.xlu0 %597
  %599 = vadd.xlane.f32.xlu0 %v596
  %v600 = vpop.xlane.xlu0 %599
  %v601 = vmul.f32 %v598, 0.17677669
  %v602 = vmul.f32 %v600, 0.17677669
  %v603 = vmax.f32 %v585, %v593
  %v604 = vmax.f32 %v586, %v594
  %v605 = vmax.f32 %v603, %v601
  %v606 = vmax.f32 %v604, %v602
  %v607 = vsub.f32 %v585, %v605
  %v608 = vsub.f32 %v586, %v606
  %v609 = vmul.f32 %v607, 1.442695
  %v610 = vpow.pop %v609
  %v611 = vmul.f32 %v608, 1.442695
  %v612 = vpow.pop %v611
  %v613 = vsub.f32 %v593, %v605
  %v614 = vsub.f32 %v594, %v606
  %v615 = vmul.f32 %v613, 1.442695
  %v616 = vpow.pop %v615
  %v617 = vmul.f32 %v614, 1.442695
  %v618 = vpow.pop %v617
  %v619 = vsub.f32 %v601, %v605
  %v620 = vsub.f32 %v602, %v606
  %v621 = vmul.f32 %v619, 1.442695
  %v622 = vpow.pop %v621
  %v623 = vmul.f32 %v620, 1.442695
  %v624 = vpow.pop %v623
  %v625 = vadd.f32 %v610, %v616
  %v626 = vadd.f32 %v612, %v618
  %v627 = vadd.f32 %v625, %v622
  %v628 = vadd.f32 %v626, %v624
  %v629 = vmul.f32 %v610, %v445
  %v630 = vmul.f32 %v612, %v446
  %v631 = vmul.f32 %v616, %v447
  %v632 = vmul.f32 %v618, %v448
  %v633 = vadd.f32 %v629, %v631
  %v634 = vadd.f32 %v630, %v632
  %v635 = vmul.f32 %v622, %v449
  %v636 = vmul.f32 %v624, %v450
  %v637 = vadd.f32 %v633, %v635
  %v638 = vadd.f32 %v634, %v636
  %v639 = vrcp.pop %v627
  %v640 = vmul.f32 %v637, %v639
  %v641 = vrcp.pop %v628
  %v642 = vmul.f32 %v638, %v641
  %v643 = vpack.c.bf16 %v514, %v512
  %v644 = vpack.c.bf16 %v578, %v576
  %v645 = vpack.c.bf16 %v642, %v640
  %v646 = vld [vmem:[%s3] sm:$0xf]
  %v647 = vld [vmem:[%s3 + $0x4] sm:$0xf]
  %v648 = vld [vmem:[%s3 + $0x8] sm:$0xf]
  %v649 = vld [vmem:[%s3 + $0xc] sm:$0xf]
  %v650 = vld [vmem:[%s3 + $0x10] sm:$0xf]
  %v651 = vld [vmem:[%s3 + $0x14] sm:$0xf]
  %v652 = vld [vmem:[%s3 + $0x18] sm:$0xf]
  %v653 = vld [vmem:[%s3 + $0x1c] sm:$0xf]
  %v654 = vld [vmem:[%s3 + $0x20] sm:$0xf]
  %v655 = vld [vmem:[%s3 + $0x24] sm:$0xf]
  %v656 = vld [vmem:[%s3 + $0x28] sm:$0xf]
  %v657 = vld [vmem:[%s3 + $0x2c] sm:$0xf]
  %v658 = vld [vmem:[%s3 + $0x30] sm:$0xf]
  %v659 = vld [vmem:[%s3 + $0x34] sm:$0xf]
  %v660 = vld [vmem:[%s3 + $0x38] sm:$0xf]
  %v661 = vld [vmem:[%s3 + $0x3c] sm:$0xf]
  %v662 = vlaneseq
  %v663 = vshrl.u32 %v662, 7
  %v664 = vsub.s32 4, %v663
  %v665 = vrot.slane %v27, %v664
  %v682 = vunpack.c.l.b16 %v646
  %v683 = vunpack.c.l.b16 %v647
  %v684 = vunpack.c.l.b16 %v648
  %v685 = vunpack.c.l.b16 %v649
  %v686 = vunpack.c.l.b16 %v650
  %v687 = vunpack.c.l.b16 %v651
  %v688 = vunpack.c.l.b16 %v652
  %v689 = vunpack.c.l.b16 %v653
  %v690 = vunpack.c.l.b16 %v654
  %v691 = vunpack.c.l.b16 %v655
  %v692 = vunpack.c.l.b16 %v656
  %v693 = vunpack.c.l.b16 %v657
  %v694 = vunpack.c.l.b16 %v658
  %v695 = vunpack.c.l.b16 %v659
  %v696 = vunpack.c.l.b16 %v660
  %v697 = vunpack.c.l.b16 %v661
  %v698 = vpack.c.b16 %v683, %v682
  %v699 = vpack.c.b16 %v685, %v684
  %v700 = vpack.c.b16 %v687, %v686
  %v701 = vpack.c.b16 %v689, %v688
  %v702 = vpack.c.b16 %v691, %v690
  %v703 = vpack.c.b16 %v693, %v692
  %v704 = vpack.c.b16 %v695, %v694
  %v705 = vpack.c.b16 %v697, %v696
  %714 = vmatprep.subr.bf16.mxu0 0
  %715 = vmatpush1.bf16.msra.mxu0 %v698
  %716 = vmatprep.subr.bf16.mxu0 0
  %717 = vmatpush1.bf16.msra.mxu0 %v699
  %718 = vmatprep.subr.bf16.mxu0 0
  %719 = vmatpush1.bf16.msra.mxu0 %v700
  %720 = vmatprep.subr.bf16.mxu0 0
  %721 = vmatpush1.bf16.msra.mxu0 %v701
  %722 = vmatprep.subr.bf16.mxu0 0
  %723 = vmatpush1.bf16.msra.mxu0 %v702
  %724 = vmatprep.subr.bf16.mxu0 0
  %725 = vmatpush1.bf16.msra.mxu0 %v703
  %726 = vmatprep.subr.bf16.mxu0 0
  %727 = vmatpush1.bf16.msra.mxu0 %v704
  %728 = vmatprep.subr.bf16.mxu0 0
  %729 = vmatpush1.bf16.msra.mxu0 %v705
  %730 = vmatprep.subr.bf16.mxu0 0
  %731 = vmatpush1.bf16.msra.mxu0 0
  %732 = vmatprep.subr.bf16.mxu0 0
  %733 = vmatpush1.bf16.msra.mxu0 0
  %734 = vmatprep.subr.bf16.mxu0 0
  %735 = vmatpush1.bf16.msra.mxu0 0
  %736 = vmatprep.subr.bf16.mxu0 0
  %737 = vmatpush1.bf16.msra.mxu0 0
  %738 = vmatprep.subr.bf16.mxu0 0
  %739 = vmatpush1.bf16.msra.mxu0 0
  %740 = vmatprep.subr.bf16.mxu0 0
  %741 = vmatpush1.bf16.msra.mxu0 0
  %742 = vmatprep.subr.bf16.mxu0 0
  %743 = vmatpush1.bf16.msra.mxu0 0
  %744 = vmatprep.subr.bf16.mxu0 0
  %745 = vmatpush1.bf16.msra.mxu0 0
  %746 = vmatprep.mubr.bf16.mxu0 0
  %747 = vmatmul.mubr.bf16.gmra.mrb[0].mxu0 %v643
  %v748 = vpop.f32.mrb[0].mxu0
  %v749 = vadd.f32 %v665, %v748
  %v750 = vpop.f32.mrb[0].mxu0
  %v751 = vpop.f32.mrb[0].mxu0
  %v752 = vadd.f32 %v665, %v751
  %v753 = vpop.f32.mrb[0].mxu0
  %754 = vmatprep.mubr.bf16.mxu0 0
  %755 = vmatmul.mubr.bf16.gmra.mrb[0].mxu0 %v644
  %v756 = vpop.f32.mrb[0].mxu0
  %v757 = vadd.f32 %v665, %v756
  %v758 = vpop.f32.mrb[0].mxu0
  %v759 = vpop.f32.mrb[0].mxu0
  %v760 = vadd.f32 %v665, %v759
  %v761 = vpop.f32.mrb[0].mxu0
  %762 = vmatprep.mubr.bf16.mxu0 0
  %763 = vmatmul.mubr.bf16.gmra.mrb[0].mxu0 %v645
  %v764 = vpop.f32.mrb[0].mxu0
  %v765 = vadd.f32 %v665, %v764
  %v766 = vpop.f32.mrb[0].mxu0
  %v767 = vpop.f32.mrb[0].mxu0
  %v768 = vadd.f32 %v665, %v767
  %v769 = vpop.f32.mrb[0].mxu0
  %770 = vdwg.mxu0
  %v771 = vadd.f32 %v749, %v132
  %v772 = vadd.f32 %v752, %v133
  %v773 = vadd.f32 %v757, %v134
  %v774 = vadd.f32 %v760, %v135
  %v775 = vadd.f32 %v765, %v136
  %v776 = vadd.f32 %v768, %v137
  %777 = vadd.xlane.f32.xlu0 %v771
  %v778 = vpop.xlane.xlu0 %777
  %779 = vadd.xlane.f32.xlu0 %v772
  %v780 = vpop.xlane.xlu0 %779
  %781 = vadd.xlane.f32.xlu0 %v773
  %v782 = vpop.xlane.xlu0 %781
  %783 = vadd.xlane.f32.xlu0 %v774
  %v784 = vpop.xlane.xlu0 %783
  %785 = vadd.xlane.f32.xlu0 %v775
  %v786 = vpop.xlane.xlu0 %785
  %787 = vadd.xlane.f32.xlu0 %v776
  %v788 = vpop.xlane.xlu0 %787
  %v789 = vmul.f32 %v778, 0.03125
  %v790 = vmul.f32 %v780, 0.03125
  %v791 = vmul.f32 %v782, 0.03125
  %v792 = vmul.f32 %v784, 0.03125
  %v793 = vmul.f32 %v786, 0.03125
  %v794 = vmul.f32 %v788, 0.03125
  %v795 = vmul.f32 %v771, %v771
  %v796 = vmul.f32 %v772, %v772
  %v797 = vmul.f32 %v773, %v773
  %v798 = vmul.f32 %v774, %v774
  %v799 = vmul.f32 %v775, %v775
  %v800 = vmul.f32 %v776, %v776
  %801 = vadd.xlane.f32.xlu0 %v795
  %v802 = vpop.xlane.xlu0 %801
  %803 = vadd.xlane.f32.xlu0 %v796
  %v804 = vpop.xlane.xlu0 %803
  %805 = vadd.xlane.f32.xlu0 %v797
  %v806 = vpop.xlane.xlu0 %805
  %807 = vadd.xlane.f32.xlu0 %v798
  %v808 = vpop.xlane.xlu0 %807
  %809 = vadd.xlane.f32.xlu0 %v799
  %v810 = vpop.xlane.xlu0 %809
  %811 = vadd.xlane.f32.xlu0 %v800
  %v812 = vpop.xlane.xlu0 %811
  %v813 = vmul.f32 %v802, 0.03125
  %v814 = vmul.f32 %v804, 0.03125
  %v815 = vmul.f32 %v806, 0.03125
  %v816 = vmul.f32 %v808, 0.03125
  %v817 = vmul.f32 %v810, 0.03125
  %v818 = vmul.f32 %v812, 0.03125
  %v819 = vmul.f32 %v789, %v789
  %v820 = vmul.f32 %v790, %v790
  %v821 = vmul.f32 %v791, %v791
  %v822 = vmul.f32 %v792, %v792
  %v823 = vmul.f32 %v793, %v793
  %v824 = vmul.f32 %v794, %v794
  %v825 = vsub.f32 %v813, %v819
  %v826 = vsub.f32 %v814, %v820
  %v827 = vsub.f32 %v815, %v821
  %v828 = vsub.f32 %v816, %v822
  %v829 = vsub.f32 %v817, %v823
  %v830 = vsub.f32 %v818, %v824
  %v831 = vsub.f32 %v771, %v789
  %v832 = vsub.f32 %v772, %v790
  %v833 = vsub.f32 %v773, %v791
  %v834 = vsub.f32 %v774, %v792
  %v835 = vsub.f32 %v775, %v793
  %v836 = vsub.f32 %v776, %v794
  %v837 = vadd.f32 %v825, 1e-06
  %v838 = vadd.f32 %v826, 1e-06
  %v839 = vadd.f32 %v827, 1e-06
  %v840 = vadd.f32 %v828, 1e-06
  %v841 = vadd.f32 %v829, 1e-06
  %v842 = vadd.f32 %v830, 1e-06
  %v843 = vrsqrt.pop %v837
  %v844 = vrsqrt.pop %v838
  %v845 = vrsqrt.pop %v839
  %v846 = vrsqrt.pop %v840
  %v847 = vrsqrt.pop %v841
  %v848 = vrsqrt.pop %v842
  %v849 = vmul.f32 %v831, %v843
  %v850 = vmul.f32 %v832, %v844
  %v851 = vmul.f32 %v833, %v845
  %v852 = vmul.f32 %v834, %v846
  %v853 = vmul.f32 %v835, %v847
  %v854 = vmul.f32 %v836, %v848
  %v855 = vlaneseq
  %v856 = vshrl.u32 %v855, 7
  %v857 = vsub.s32 0, %v856
  %v858 = vrot.slane %v28, %v857
  %v859 = vmul.f32 %v849, %v858
  %v860 = vmul.f32 %v850, %v858
  %v861 = vmul.f32 %v851, %v858
  %v862 = vmul.f32 %v852, %v858
  %v863 = vmul.f32 %v853, %v858
  %v864 = vmul.f32 %v854, %v858
  %v865 = vlaneseq
  %v866 = vshrl.u32 %v865, 7
  %v867 = vsub.s32 1, %v866
  %v868 = vrot.slane %v28, %v867
  %v869 = vadd.f32 %v859, %v868
  %v870 = vadd.f32 %v860, %v868
  %v871 = vadd.f32 %v861, %v868
  %v872 = vadd.f32 %v862, %v868
  %v873 = vadd.f32 %v863, %v868
  %v874 = vadd.f32 %v864, %v868
  %v875 = vpack.c.bf16 %v870, %v869
  %v876 = vpack.c.bf16 %v872, %v871
  %v877 = vpack.c.bf16 %v874, %v873
  %s878 = scalar_lea.vmem %s3, 64
  %v879 = vld [vmem:[%s878] sm:$0xf]
  %v880 = vld [vmem:[%s878 + $0x4] sm:$0xf]
  %v881 = vld [vmem:[%s878 + $0x8] sm:$0xf]
  %v882 = vld [vmem:[%s878 + $0xc] sm:$0xf]
  %v883 = vld [vmem:[%s878 + $0x10] sm:$0xf]
  %v884 = vld [vmem:[%s878 + $0x14] sm:$0xf]
  %v885 = vld [vmem:[%s878 + $0x18] sm:$0xf]
  %v886 = vld [vmem:[%s878 + $0x1c] sm:$0xf]
  %v887 = vld [vmem:[%s878 + $0x20] sm:$0xf]
  %v888 = vld [vmem:[%s878 + $0x24] sm:$0xf]
  %v889 = vld [vmem:[%s878 + $0x28] sm:$0xf]
  %v890 = vld [vmem:[%s878 + $0x2c] sm:$0xf]
  %v891 = vld [vmem:[%s878 + $0x30] sm:$0xf]
  %v892 = vld [vmem:[%s878 + $0x34] sm:$0xf]
  %v893 = vld [vmem:[%s878 + $0x38] sm:$0xf]
  %v894 = vld [vmem:[%s878 + $0x3c] sm:$0xf]
  %v895 = vlaneseq
  %v896 = vshrl.u32 %v895, 7
  %v897 = vsub.s32 5, %v896
  %v898 = vrot.slane %v27, %v897
  %v915 = vunpack.c.l.b16 %v879
  %v916 = vunpack.c.l.b16 %v880
  %v917 = vunpack.c.l.b16 %v881
  %v918 = vunpack.c.l.b16 %v882
  %v919 = vunpack.c.l.b16 %v883
  %v920 = vunpack.c.l.b16 %v884
  %v921 = vunpack.c.l.b16 %v885
  %v922 = vunpack.c.l.b16 %v886
  %v923 = vunpack.c.l.b16 %v887
  %v924 = vunpack.c.l.b16 %v888
  %v925 = vunpack.c.l.b16 %v889
  %v926 = vunpack.c.l.b16 %v890
  %v927 = vunpack.c.l.b16 %v891
  %v928 = vunpack.c.l.b16 %v892
  %v929 = vunpack.c.l.b16 %v893
  %v930 = vunpack.c.l.b16 %v894
  %v931 = vpack.c.b16 %v916, %v915
  %v932 = vpack.c.b16 %v918, %v917
  %v933 = vpack.c.b16 %v920, %v919
  %v934 = vpack.c.b16 %v922, %v921
  %v935 = vpack.c.b16 %v924, %v923
  %v936 = vpack.c.b16 %v926, %v925
  %v937 = vpack.c.b16 %v928, %v927
  %v938 = vpack.c.b16 %v930, %v929
  %947 = vmatprep.subr.bf16.mxu0 0
  %948 = vmatpush1.bf16.msra.mxu0 %v931
  %949 = vmatprep.subr.bf16.mxu0 0
  %950 = vmatpush1.bf16.msra.mxu0 %v932
  %951 = vmatprep.subr.bf16.mxu0 0
  %952 = vmatpush1.bf16.msra.mxu0 %v933
  %953 = vmatprep.subr.bf16.mxu0 0
  %954 = vmatpush1.bf16.msra.mxu0 %v934
  %955 = vmatprep.subr.bf16.mxu0 0
  %956 = vmatpush1.bf16.msra.mxu0 %v935
  %957 = vmatprep.subr.bf16.mxu0 0
  %958 = vmatpush1.bf16.msra.mxu0 %v936
  %959 = vmatprep.subr.bf16.mxu0 0
  %960 = vmatpush1.bf16.msra.mxu0 %v937
  %961 = vmatprep.subr.bf16.mxu0 0
  %962 = vmatpush1.bf16.msra.mxu0 %v938
  %963 = vmatprep.subr.bf16.mxu0 0
  %964 = vmatpush1.bf16.msra.mxu0 0
  %965 = vmatprep.subr.bf16.mxu0 0
  %966 = vmatpush1.bf16.msra.mxu0 0
  %967 = vmatprep.subr.bf16.mxu0 0
  %968 = vmatpush1.bf16.msra.mxu0 0
  %969 = vmatprep.subr.bf16.mxu0 0
  %970 = vmatpush1.bf16.msra.mxu0 0
  %971 = vmatprep.subr.bf16.mxu0 0
  %972 = vmatpush1.bf16.msra.mxu0 0
  %973 = vmatprep.subr.bf16.mxu0 0
  %974 = vmatpush1.bf16.msra.mxu0 0
  %975 = vmatprep.subr.bf16.mxu0 0
  %976 = vmatpush1.bf16.msra.mxu0 0
  %977 = vmatprep.subr.bf16.mxu0 0
  %978 = vmatpush1.bf16.msra.mxu0 0
  %979 = vmatprep.mubr.bf16.mxu0 0
  %980 = vmatmul.mubr.bf16.gmra.mrb[0].mxu0 %v875
  %v981 = vpop.f32.mrb[0].mxu0
  %v982 = vadd.f32 %v898, %v981
  %v983 = vpop.f32.mrb[0].mxu0
  %v984 = vpop.f32.mrb[0].mxu0
  %v985 = vadd.f32 %v898, %v984
  %v986 = vpop.f32.mrb[0].mxu0
  %987 = vmatprep.mubr.bf16.mxu0 0
  %988 = vmatmul.mubr.bf16.gmra.mrb[0].mxu0 %v876
  %v989 = vpop.f32.mrb[0].mxu0
  %v990 = vadd.f32 %v898, %v989
  %v991 = vpop.f32.mrb[0].mxu0
  %v992 = vpop.f32.mrb[0].mxu0
  %v993 = vadd.f32 %v898, %v992
  %v994 = vpop.f32.mrb[0].mxu0
  %995 = vmatprep.mubr.bf16.mxu0 0
  %996 = vmatmul.mubr.bf16.gmra.mrb[0].mxu0 %v877
  %v997 = vpop.f32.mrb[0].mxu0
  %v998 = vadd.f32 %v898, %v997
  %v999 = vpop.f32.mrb[0].mxu0
  %v1000 = vpop.f32.mrb[0].mxu0
  %v1001 = vadd.f32 %v898, %v1000
  %v1002 = vpop.f32.mrb[0].mxu0
  %1003 = vdwg.mxu0
  %v1004 = vmax.f32 %v982, 0.0
  %v1005 = vmax.f32 %v985, 0.0
  %v1006 = vmax.f32 %v990, 0.0
  %v1007 = vmax.f32 %v993, 0.0
  %v1008 = vmax.f32 %v998, 0.0
  %v1009 = vmax.f32 %v1001, 0.0
  %v1010 = vpack.c.bf16 %v1005, %v1004
  %v1011 = vpack.c.bf16 %v1007, %v1006
  %v1012 = vpack.c.bf16 %v1009, %v1008
  %s1013 = scalar_lea.vmem %s3, 128
  %v1014 = vld [vmem:[%s1013] sm:$0xf]
  %v1015 = vld [vmem:[%s1013 + $0x4] sm:$0xf]
  %v1016 = vld [vmem:[%s1013 + $0x8] sm:$0xf]
  %v1017 = vld [vmem:[%s1013 + $0xc] sm:$0xf]
  %v1018 = vld [vmem:[%s1013 + $0x10] sm:$0xf]
  %v1019 = vld [vmem:[%s1013 + $0x14] sm:$0xf]
  %v1020 = vld [vmem:[%s1013 + $0x18] sm:$0xf]
  %v1021 = vld [vmem:[%s1013 + $0x1c] sm:$0xf]
  %v1022 = vld [vmem:[%s1013 + $0x20] sm:$0xf]
  %v1023 = vld [vmem:[%s1013 + $0x24] sm:$0xf]
  %v1024 = vld [vmem:[%s1013 + $0x28] sm:$0xf]
  %v1025 = vld [vmem:[%s1013 + $0x2c] sm:$0xf]
  %v1026 = vld [vmem:[%s1013 + $0x30] sm:$0xf]
  %v1027 = vld [vmem:[%s1013 + $0x34] sm:$0xf]
  %v1028 = vld [vmem:[%s1013 + $0x38] sm:$0xf]
  %v1029 = vld [vmem:[%s1013 + $0x3c] sm:$0xf]
  %v1030 = vlaneseq
  %v1031 = vshrl.u32 %v1030, 7
  %v1032 = vsub.s32 6, %v1031
  %v1033 = vrot.slane %v27, %v1032
  %v1050 = vunpack.c.l.b16 %v1014
  %v1051 = vunpack.c.l.b16 %v1015
  %v1052 = vunpack.c.l.b16 %v1016
  %v1053 = vunpack.c.l.b16 %v1017
  %v1054 = vunpack.c.l.b16 %v1018
  %v1055 = vunpack.c.l.b16 %v1019
  %v1056 = vunpack.c.l.b16 %v1020
  %v1057 = vunpack.c.l.b16 %v1021
  %v1058 = vunpack.c.l.b16 %v1022
  %v1059 = vunpack.c.l.b16 %v1023
  %v1060 = vunpack.c.l.b16 %v1024
  %v1061 = vunpack.c.l.b16 %v1025
  %v1062 = vunpack.c.l.b16 %v1026
  %v1063 = vunpack.c.l.b16 %v1027
  %v1064 = vunpack.c.l.b16 %v1028
  %v1065 = vunpack.c.l.b16 %v1029
  %v1066 = vpack.c.b16 %v1051, %v1050
  %v1067 = vpack.c.b16 %v1053, %v1052
  %v1068 = vpack.c.b16 %v1055, %v1054
  %v1069 = vpack.c.b16 %v1057, %v1056
  %v1070 = vpack.c.b16 %v1059, %v1058
  %v1071 = vpack.c.b16 %v1061, %v1060
  %v1072 = vpack.c.b16 %v1063, %v1062
  %v1073 = vpack.c.b16 %v1065, %v1064
  %1082 = vmatprep.subr.bf16.mxu0 0
  %1083 = vmatpush1.bf16.msra.mxu0 %v1066
  %1084 = vmatprep.subr.bf16.mxu0 0
  %1085 = vmatpush1.bf16.msra.mxu0 %v1067
  %1086 = vmatprep.subr.bf16.mxu0 0
  %1087 = vmatpush1.bf16.msra.mxu0 %v1068
  %1088 = vmatprep.subr.bf16.mxu0 0
  %1089 = vmatpush1.bf16.msra.mxu0 %v1069
  %1090 = vmatprep.subr.bf16.mxu0 0
  %1091 = vmatpush1.bf16.msra.mxu0 %v1070
  %1092 = vmatprep.subr.bf16.mxu0 0
  %1093 = vmatpush1.bf16.msra.mxu0 %v1071
  %1094 = vmatprep.subr.bf16.mxu0 0
  %1095 = vmatpush1.bf16.msra.mxu0 %v1072
  %1096 = vmatprep.subr.bf16.mxu0 0
  %1097 = vmatpush1.bf16.msra.mxu0 %v1073
  %1098 = vmatprep.subr.bf16.mxu0 0
  %1099 = vmatpush1.bf16.msra.mxu0 0
  %1100 = vmatprep.subr.bf16.mxu0 0
  %1101 = vmatpush1.bf16.msra.mxu0 0
  %1102 = vmatprep.subr.bf16.mxu0 0
  %1103 = vmatpush1.bf16.msra.mxu0 0
  %1104 = vmatprep.subr.bf16.mxu0 0
  %1105 = vmatpush1.bf16.msra.mxu0 0
  %1106 = vmatprep.subr.bf16.mxu0 0
  %1107 = vmatpush1.bf16.msra.mxu0 0
  %1108 = vmatprep.subr.bf16.mxu0 0
  %1109 = vmatpush1.bf16.msra.mxu0 0
  %1110 = vmatprep.subr.bf16.mxu0 0
  %1111 = vmatpush1.bf16.msra.mxu0 0
  %1112 = vmatprep.subr.bf16.mxu0 0
  %1113 = vmatpush1.bf16.msra.mxu0 0
  %1114 = vmatprep.mubr.bf16.mxu0 0
  %1115 = vmatmul.mubr.bf16.gmra.mrb[0].mxu0 %v1010
  %v1116 = vpop.f32.mrb[0].mxu0
  %v1117 = vadd.f32 %v1033, %v1116
  %v1118 = vpop.f32.mrb[0].mxu0
  %v1119 = vpop.f32.mrb[0].mxu0
  %v1120 = vadd.f32 %v1033, %v1119
  %v1121 = vpop.f32.mrb[0].mxu0
  %1122 = vmatprep.mubr.bf16.mxu0 0
  %1123 = vmatmul.mubr.bf16.gmra.mrb[0].mxu0 %v1011
  %v1124 = vpop.f32.mrb[0].mxu0
  %v1125 = vadd.f32 %v1033, %v1124
  %v1126 = vpop.f32.mrb[0].mxu0
  %v1127 = vpop.f32.mrb[0].mxu0
  %v1128 = vadd.f32 %v1033, %v1127
  %v1129 = vpop.f32.mrb[0].mxu0
  %1130 = vmatprep.mubr.bf16.mxu0 0
  %1131 = vmatmul.mubr.bf16.gmra.mrb[0].mxu0 %v1012
  %v1132 = vpop.f32.mrb[0].mxu0
  %v1133 = vadd.f32 %v1033, %v1132
  %v1134 = vpop.f32.mrb[0].mxu0
  %v1135 = vpop.f32.mrb[0].mxu0
  %v1136 = vadd.f32 %v1033, %v1135
  %v1137 = vpop.f32.mrb[0].mxu0
  %1138 = vdwg.mxu0
  %v1139 = vadd.f32 %v1117, %v869
  %v1140 = vadd.f32 %v1120, %v870
  %v1141 = vadd.f32 %v1125, %v871
  %v1142 = vadd.f32 %v1128, %v872
  %v1143 = vadd.f32 %v1133, %v873
  %v1144 = vadd.f32 %v1136, %v874
  %1145 = vadd.xlane.f32.xlu0 %v1139
  %v1146 = vpop.xlane.xlu0 %1145
  %1147 = vadd.xlane.f32.xlu0 %v1140
  %v1148 = vpop.xlane.xlu0 %1147
  %1149 = vadd.xlane.f32.xlu0 %v1141
  %v1150 = vpop.xlane.xlu0 %1149
  %1151 = vadd.xlane.f32.xlu0 %v1142
  %v1152 = vpop.xlane.xlu0 %1151
  %1153 = vadd.xlane.f32.xlu0 %v1143
  %v1154 = vpop.xlane.xlu0 %1153
  %1155 = vadd.xlane.f32.xlu0 %v1144
  %v1156 = vpop.xlane.xlu0 %1155
  %v1157 = vmul.f32 %v1146, 0.03125
  %v1158 = vmul.f32 %v1148, 0.03125
  %v1159 = vmul.f32 %v1150, 0.03125
  %v1160 = vmul.f32 %v1152, 0.03125
  %v1161 = vmul.f32 %v1154, 0.03125
  %v1162 = vmul.f32 %v1156, 0.03125
  %v1163 = vmul.f32 %v1139, %v1139
  %v1164 = vmul.f32 %v1140, %v1140
  %v1165 = vmul.f32 %v1141, %v1141
  %v1166 = vmul.f32 %v1142, %v1142
  %v1167 = vmul.f32 %v1143, %v1143
  %v1168 = vmul.f32 %v1144, %v1144
  %1169 = vadd.xlane.f32.xlu0 %v1163
  %v1170 = vpop.xlane.xlu0 %1169
  %1171 = vadd.xlane.f32.xlu0 %v1164
  %v1172 = vpop.xlane.xlu0 %1171
  %1173 = vadd.xlane.f32.xlu0 %v1165
  %v1174 = vpop.xlane.xlu0 %1173
  %1175 = vadd.xlane.f32.xlu0 %v1166
  %v1176 = vpop.xlane.xlu0 %1175
  %1177 = vadd.xlane.f32.xlu0 %v1167
  %v1178 = vpop.xlane.xlu0 %1177
  %1179 = vadd.xlane.f32.xlu0 %v1168
  %v1180 = vpop.xlane.xlu0 %1179
  %v1181 = vmul.f32 %v1170, 0.03125
  %v1182 = vmul.f32 %v1172, 0.03125
  %v1183 = vmul.f32 %v1174, 0.03125
  %v1184 = vmul.f32 %v1176, 0.03125
  %v1185 = vmul.f32 %v1178, 0.03125
  %v1186 = vmul.f32 %v1180, 0.03125
  %v1187 = vmul.f32 %v1157, %v1157
  %v1188 = vmul.f32 %v1158, %v1158
  %v1189 = vmul.f32 %v1159, %v1159
  %v1190 = vmul.f32 %v1160, %v1160
  %v1191 = vmul.f32 %v1161, %v1161
  %v1192 = vmul.f32 %v1162, %v1162
  %v1193 = vsub.f32 %v1181, %v1187
  %v1194 = vsub.f32 %v1182, %v1188
  %v1195 = vsub.f32 %v1183, %v1189
  %v1196 = vsub.f32 %v1184, %v1190
  %v1197 = vsub.f32 %v1185, %v1191
  %v1198 = vsub.f32 %v1186, %v1192
  %v1199 = vsub.f32 %v1139, %v1157
  %v1200 = vsub.f32 %v1140, %v1158
  %v1201 = vsub.f32 %v1141, %v1159
  %v1202 = vsub.f32 %v1142, %v1160
  %v1203 = vsub.f32 %v1143, %v1161
  %v1204 = vsub.f32 %v1144, %v1162
  %v1205 = vadd.f32 %v1193, 1e-06
  %v1206 = vadd.f32 %v1194, 1e-06
  %v1207 = vadd.f32 %v1195, 1e-06
  %v1208 = vadd.f32 %v1196, 1e-06
  %v1209 = vadd.f32 %v1197, 1e-06
  %v1210 = vadd.f32 %v1198, 1e-06
  %v1211 = vrsqrt.pop %v1205
  %v1212 = vrsqrt.pop %v1206
  %v1213 = vrsqrt.pop %v1207
  %v1214 = vrsqrt.pop %v1208
  %v1215 = vrsqrt.pop %v1209
  %v1216 = vrsqrt.pop %v1210
  %v1217 = vmul.f32 %v1199, %v1211
  %v1218 = vmul.f32 %v1200, %v1212
  %v1219 = vmul.f32 %v1201, %v1213
  %v1220 = vmul.f32 %v1202, %v1214
  %v1221 = vmul.f32 %v1203, %v1215
  %v1222 = vmul.f32 %v1204, %v1216
  %v1223 = vlaneseq
  %v1224 = vshrl.u32 %v1223, 7
  %v1225 = vsub.s32 2, %v1224
  %v1226 = vrot.slane %v28, %v1225
  %v1227 = vmul.f32 %v1217, %v1226
  %v1228 = vmul.f32 %v1218, %v1226
  %v1229 = vmul.f32 %v1219, %v1226
  %v1230 = vmul.f32 %v1220, %v1226
  %v1231 = vmul.f32 %v1221, %v1226
  %v1232 = vmul.f32 %v1222, %v1226
  %v1233 = vlaneseq
  %v1234 = vshrl.u32 %v1233, 7
  %v1235 = vsub.s32 3, %v1234
  %v1236 = vrot.slane %v28, %v1235
  %v1237 = vadd.f32 %v1227, %v1236
  %v1238 = vadd.f32 %v1228, %v1236
  %v1239 = vadd.f32 %v1229, %v1236
  %v1240 = vadd.f32 %v1230, %v1236
  %v1241 = vadd.f32 %v1231, %v1236
  %v1242 = vadd.f32 %v1232, %v1236
  %v1243 = vmax.f32 %v1237, 0.0
  %v1244 = vmax.f32 %v1238, 0.0
  %v1245 = vmax.f32 %v1239, 0.0
  %v1246 = vmax.f32 %v1240, 0.0
  %v1247 = vmax.f32 %v1241, 0.0
  %v1248 = vmax.f32 %v1242, 0.0
  %v1249 = vpack.c.bf16 %v1244, %v1243
  %v1250 = vpack.c.bf16 %v1246, %v1245
  %v1251 = vpack.c.bf16 %v1248, %v1247
  %s1252 = scalar_lea.vmem %s3, 192
  %v1253 = vld [vmem:[%s1252] sm:$0xf]
  %v1254 = vld [vmem:[%s1252 + $0x4] sm:$0xf]
  %v1255 = vld [vmem:[%s1252 + $0x8] sm:$0xf]
  %v1256 = vld [vmem:[%s1252 + $0xc] sm:$0xf]
  %v1257 = vld [vmem:[%s1252 + $0x10] sm:$0xf]
  %v1258 = vld [vmem:[%s1252 + $0x14] sm:$0xf]
  %v1259 = vld [vmem:[%s1252 + $0x18] sm:$0xf]
  %v1260 = vld [vmem:[%s1252 + $0x1c] sm:$0xf]
  %v1261 = vld [vmem:[%s1252 + $0x20] sm:$0xf]
  %v1262 = vld [vmem:[%s1252 + $0x24] sm:$0xf]
  %v1263 = vld [vmem:[%s1252 + $0x28] sm:$0xf]
  %v1264 = vld [vmem:[%s1252 + $0x2c] sm:$0xf]
  %v1265 = vld [vmem:[%s1252 + $0x30] sm:$0xf]
  %v1266 = vld [vmem:[%s1252 + $0x34] sm:$0xf]
  %v1267 = vld [vmem:[%s1252 + $0x38] sm:$0xf]
  %v1268 = vld [vmem:[%s1252 + $0x3c] sm:$0xf]
  %v1269 = vlaneseq
  %v1270 = vshrl.u32 %v1269, 7
  %v1271 = vsub.s32 7, %v1270
  %v1272 = vrot.slane %v27, %v1271
  %v1289 = vunpack.c.l.b16 %v1253
  %v1290 = vunpack.c.l.b16 %v1254
  %v1291 = vunpack.c.l.b16 %v1255
  %v1292 = vunpack.c.l.b16 %v1256
  %v1293 = vunpack.c.l.b16 %v1257
  %v1294 = vunpack.c.l.b16 %v1258
  %v1295 = vunpack.c.l.b16 %v1259
  %v1296 = vunpack.c.l.b16 %v1260
  %v1297 = vunpack.c.l.b16 %v1261
  %v1298 = vunpack.c.l.b16 %v1262
  %v1299 = vunpack.c.l.b16 %v1263
  %v1300 = vunpack.c.l.b16 %v1264
  %v1301 = vunpack.c.l.b16 %v1265
  %v1302 = vunpack.c.l.b16 %v1266
  %v1303 = vunpack.c.l.b16 %v1267
  %v1304 = vunpack.c.l.b16 %v1268
  %v1305 = vpack.c.b16 %v1290, %v1289
  %v1306 = vpack.c.b16 %v1292, %v1291
  %v1307 = vpack.c.b16 %v1294, %v1293
  %v1308 = vpack.c.b16 %v1296, %v1295
  %v1309 = vpack.c.b16 %v1298, %v1297
  %v1310 = vpack.c.b16 %v1300, %v1299
  %v1311 = vpack.c.b16 %v1302, %v1301
  %v1312 = vpack.c.b16 %v1304, %v1303
  %1321 = vmatprep.subr.bf16.mxu0 0
  %1322 = vmatpush1.bf16.msra.mxu0 %v1305
  %1323 = vmatprep.subr.bf16.mxu0 0
  %1324 = vmatpush1.bf16.msra.mxu0 %v1306
  %1325 = vmatprep.subr.bf16.mxu0 0
  %1326 = vmatpush1.bf16.msra.mxu0 %v1307
  %1327 = vmatprep.subr.bf16.mxu0 0
  %1328 = vmatpush1.bf16.msra.mxu0 %v1308
  %1329 = vmatprep.subr.bf16.mxu0 0
  %1330 = vmatpush1.bf16.msra.mxu0 %v1309
  %1331 = vmatprep.subr.bf16.mxu0 0
  %1332 = vmatpush1.bf16.msra.mxu0 %v1310
  %1333 = vmatprep.subr.bf16.mxu0 0
  %1334 = vmatpush1.bf16.msra.mxu0 %v1311
  %1335 = vmatprep.subr.bf16.mxu0 0
  %1336 = vmatpush1.bf16.msra.mxu0 %v1312
  %1337 = vmatprep.subr.bf16.mxu0 0
  %1338 = vmatpush1.bf16.msra.mxu0 0
  %1339 = vmatprep.subr.bf16.mxu0 0
  %1340 = vmatpush1.bf16.msra.mxu0 0
  %1341 = vmatprep.subr.bf16.mxu0 0
  %1342 = vmatpush1.bf16.msra.mxu0 0
  %1343 = vmatprep.subr.bf16.mxu0 0
  %1344 = vmatpush1.bf16.msra.mxu0 0
  %1345 = vmatprep.subr.bf16.mxu0 0
  %1346 = vmatpush1.bf16.msra.mxu0 0
  %1347 = vmatprep.subr.bf16.mxu0 0
  %1348 = vmatpush1.bf16.msra.mxu0 0
  %1349 = vmatprep.subr.bf16.mxu0 0
  %1350 = vmatpush1.bf16.msra.mxu0 0
  %1351 = vmatprep.subr.bf16.mxu0 0
  %1352 = vmatpush1.bf16.msra.mxu0 0
  %1353 = vmatprep.mubr.bf16.mxu0 0
  %1354 = vmatmul.mubr.bf16.gmra.mrb[0].mxu0 %v1249
  %v1355 = vpop.f32.mrb[0].mxu0
  %v1356 = vadd.f32 %v1272, %v1355
  %v1357 = vpop.f32.mrb[0].mxu0
  %v1358 = vpop.f32.mrb[0].mxu0
  %v1359 = vadd.f32 %v1272, %v1358
  %v1360 = vpop.f32.mrb[0].mxu0
  %1361 = vmatprep.mubr.bf16.mxu0 0
  %1362 = vmatmul.mubr.bf16.gmra.mrb[0].mxu0 %v1250
  %v1363 = vpop.f32.mrb[0].mxu0
  %v1364 = vadd.f32 %v1272, %v1363
  %v1365 = vpop.f32.mrb[0].mxu0
  %v1366 = vpop.f32.mrb[0].mxu0
  %v1367 = vadd.f32 %v1272, %v1366
  %v1368 = vpop.f32.mrb[0].mxu0
  %1369 = vmatprep.mubr.bf16.mxu0 0
  %1370 = vmatmul.mubr.bf16.gmra.mrb[0].mxu0 %v1251
  %v1371 = vpop.f32.mrb[0].mxu0
  %v1372 = vadd.f32 %v1272, %v1371
  %v1373 = vpop.f32.mrb[0].mxu0
  %v1374 = vpop.f32.mrb[0].mxu0
  %v1375 = vadd.f32 %v1272, %v1374
  %v1376 = vpop.f32.mrb[0].mxu0
  %1377 = vdwg.mxu0
  %v1378 = vmax.f32 %v1356, 0.0
  %v1379 = vmax.f32 %v1359, 0.0
  %v1380 = vmax.f32 %v1364, 0.0
  %v1381 = vmax.f32 %v1367, 0.0
  %v1382 = vmax.f32 %v1372, 0.0
  %v1383 = vmax.f32 %v1375, 0.0
  %v1384 = vpack.c.bf16 %v1379, %v1378
  %v1385 = vpack.c.bf16 %v1381, %v1380
  %v1386 = vpack.c.bf16 %v1383, %v1382
  %v1387 = vld [vmem:[%s4] sm:$0xf]
  %v1388 = vld [vmem:[%s4 + $0x4] sm:$0xf]
  %v1389 = vld [vmem:[%s4 + $0x8] sm:$0xf]
  %v1390 = vld [vmem:[%s4 + $0xc] sm:$0xf]
  %v1391 = vld [vmem:[%s4 + $0x10] sm:$0xf]
  %v1392 = vld [vmem:[%s4 + $0x14] sm:$0xf]
  %v1393 = vld [vmem:[%s4 + $0x18] sm:$0xf]
  %v1394 = vld [vmem:[%s4 + $0x1c] sm:$0xf]
  %v1395 = vld [vmem:[%s4 + $0x20] sm:$0xf]
  %v1396 = vld [vmem:[%s4 + $0x24] sm:$0xf]
  %v1397 = vld [vmem:[%s4 + $0x28] sm:$0xf]
  %v1398 = vld [vmem:[%s4 + $0x2c] sm:$0xf]
  %v1399 = vld [vmem:[%s4 + $0x30] sm:$0xf]
  %v1400 = vld [vmem:[%s4 + $0x34] sm:$0xf]
  %v1401 = vld [vmem:[%s4 + $0x38] sm:$0xf]
  %v1402 = vld [vmem:[%s4 + $0x3c] sm:$0xf]
  %v1403 = vld [vmem:[%s6] sm:$0x1]
  %v1405 = vlaneseq
  %v1406 = vshrl.u32 %v1405, 7
  %v1407 = vsub.s32 0, %v1406
  %v1408 = vrot.slane %v1403, %v1407
  %v1426 = vunpack.c.l.b16 %v1387
  %v1427 = vunpack.c.l.b16 %v1388
  %v1428 = vunpack.c.l.b16 %v1389
  %v1429 = vunpack.c.l.b16 %v1390
  %v1430 = vunpack.c.l.b16 %v1391
  %v1431 = vunpack.c.l.b16 %v1392
  %v1432 = vunpack.c.l.b16 %v1393
  %v1433 = vunpack.c.l.b16 %v1394
  %v1434 = vunpack.c.l.b16 %v1395
  %v1435 = vunpack.c.l.b16 %v1396
  %v1436 = vunpack.c.l.b16 %v1397
  %v1437 = vunpack.c.l.b16 %v1398
  %v1438 = vunpack.c.l.b16 %v1399
  %v1439 = vunpack.c.l.b16 %v1400
  %v1440 = vunpack.c.l.b16 %v1401
  %v1441 = vunpack.c.l.b16 %v1402
  %v1442 = vpack.c.b16 %v1427, %v1426
  %v1443 = vpack.c.b16 %v1429, %v1428
  %v1444 = vpack.c.b16 %v1431, %v1430
  %v1445 = vpack.c.b16 %v1433, %v1432
  %v1446 = vpack.c.b16 %v1435, %v1434
  %v1447 = vpack.c.b16 %v1437, %v1436
  %v1448 = vpack.c.b16 %v1439, %v1438
  %v1449 = vpack.c.b16 %v1441, %v1440
  %1458 = vmatprep.subr.bf16.mxu0 0
  %1459 = vmatpush1.bf16.msra.mxu0 %v1442
  %1460 = vmatprep.subr.bf16.mxu0 0
  %1461 = vmatpush1.bf16.msra.mxu0 %v1443
  %1462 = vmatprep.subr.bf16.mxu0 0
  %1463 = vmatpush1.bf16.msra.mxu0 %v1444
  %1464 = vmatprep.subr.bf16.mxu0 0
  %1465 = vmatpush1.bf16.msra.mxu0 %v1445
  %1466 = vmatprep.subr.bf16.mxu0 0
  %1467 = vmatpush1.bf16.msra.mxu0 %v1446
  %1468 = vmatprep.subr.bf16.mxu0 0
  %1469 = vmatpush1.bf16.msra.mxu0 %v1447
  %1470 = vmatprep.subr.bf16.mxu0 0
  %1471 = vmatpush1.bf16.msra.mxu0 %v1448
  %1472 = vmatprep.subr.bf16.mxu0 0
  %1473 = vmatpush1.bf16.msra.mxu0 %v1449
  %1474 = vmatprep.subr.bf16.mxu0 0
  %1475 = vmatpush1.bf16.msra.mxu0 0
  %1476 = vmatprep.subr.bf16.mxu0 0
  %1477 = vmatpush1.bf16.msra.mxu0 0
  %1478 = vmatprep.subr.bf16.mxu0 0
  %1479 = vmatpush1.bf16.msra.mxu0 0
  %1480 = vmatprep.subr.bf16.mxu0 0
  %1481 = vmatpush1.bf16.msra.mxu0 0
  %1482 = vmatprep.subr.bf16.mxu0 0
  %1483 = vmatpush1.bf16.msra.mxu0 0
  %1484 = vmatprep.subr.bf16.mxu0 0
  %1485 = vmatpush1.bf16.msra.mxu0 0
  %1486 = vmatprep.subr.bf16.mxu0 0
  %1487 = vmatpush1.bf16.msra.mxu0 0
  %1488 = vmatprep.subr.bf16.mxu0 0
  %1489 = vmatpush1.bf16.msra.mxu0 0
  %1490 = vmatprep.mubr.bf16.mxu0 0
  %1491 = vmatmul.mubr.bf16.gmra.mrb[0].mxu0 %v1384
  %v1492 = vpop.f32.mrb[0].mxu0
  %v1493 = vadd.f32 %v1408, %v1492
  %v1494 = vpop.f32.mrb[0].mxu0
  %v1495 = vpop.f32.mrb[0].mxu0
  %v1496 = vadd.f32 %v1408, %v1495
  %v1497 = vpop.f32.mrb[0].mxu0
  %1498 = vmatprep.mubr.bf16.mxu0 0
  %1499 = vmatmul.mubr.bf16.gmra.mrb[0].mxu0 %v1385
  %v1500 = vpop.f32.mrb[0].mxu0
  %v1501 = vadd.f32 %v1408, %v1500
  %v1502 = vpop.f32.mrb[0].mxu0
  %v1503 = vpop.f32.mrb[0].mxu0
  %v1504 = vadd.f32 %v1408, %v1503
  %v1505 = vpop.f32.mrb[0].mxu0
  %1506 = vmatprep.mubr.bf16.mxu0 0
  %1507 = vmatmul.mubr.bf16.gmra.mrb[0].mxu0 %v1386
  %v1508 = vpop.f32.mrb[0].mxu0
  %v1509 = vadd.f32 %v1408, %v1508
  %v1510 = vpop.f32.mrb[0].mxu0
  %v1511 = vpop.f32.mrb[0].mxu0
  %v1512 = vadd.f32 %v1408, %v1511
  %v1513 = vpop.f32.mrb[0].mxu0
  %1514 = vdwg.mxu0
  %1515 = vst [vmem:[%s7] sm:$0xff] %v1493
  %1516 = vst [vmem:[%s7 + $0x8] sm:$0xff] %v1496
  %1517 = vst [vmem:[%s7 + $0x10] sm:$0xff] %v1501
  %1518 = vst [vmem:[%s7 + $0x18] sm:$0xff] %v1504
  %1519 = vst [vmem:[%s7 + $0x20] sm:$0xff] %v1509
  %1520 = vst [vmem:[%s7 + $0x28] sm:$0xff] %v1512
  // Predicated region
  $region30: #{attention_actor_forward.1} parent=0 // pred_check
    _
  $region31: #{attention_actor_forward.1} parent=0 // pred_check_branch
    %1522 = sbr.rel (0) target = $region33
  $region32: #{attention_actor_forward.1} parent=0 // pred_region
    _
  $region33: #{attention_actor_forward.1} parent=0 // pred_fallthru
    _
  // Predicated region
  $region34: #{attention_actor_forward.1} parent=0 // pred_check
    _
  $region35: #{attention_actor_forward.1} parent=0 // pred_check_branch
    %1524 = sbr.rel (0) target = $region37
  $region36: #{attention_actor_forward.1} parent=0 // pred_region
    _
  $region37: #{attention_actor_forward.1} parent=0 // pred_fallthru
    _

</llo_original>
